<compile_context>
chip_gen: v7x
topology: tpu7x:2x2x1
jax: 0.10.0
libtpu: 0.0.40
codegen_flags: <defaults>
</compile_context>

<pallas_src>
import functools

import jax
import jax.numpy as jnp
import numpy as np
from jax.experimental import pallas as pl
from jax.experimental.pallas import tpu as pltpu

EPS = 1e-5


def _bottleneck_kernel(x_ref, w1_ref, w2_ref, w3_ref,
                       g1_ref, b1_ref, g2_ref, b2_ref, g3_ref, b3_ref,
                       o_ref, pad_ref, *, N, H, W, Cin, C, Cexp):
    NHW = N * H * W
    inv_n = 1.0 / float(NHW)

    def bn(y, g, b, relu):
        # Training-mode BatchNorm2d folded into one per-channel scale/shift.
        # One-pass stats in f32; clamp the variance at 0 to guard the
        # s2/n - mean^2 cancellation flagged by the review.
        s1 = jnp.sum(y, axis=0, keepdims=True)
        s2 = jnp.sum(y * y, axis=0, keepdims=True)
        mean = s1 * inv_n
        var = jnp.maximum(s2 * inv_n - mean * mean, 0.0)
        scale = g * jax.lax.rsqrt(var + EPS)
        shift = b - mean * scale
        out = y * scale + shift
        return jnp.maximum(out, 0.0) if relu else out

    x_f32 = x_ref[...]                       # (NHW, Cin=128) f32, lane-dense identity path
    x_bf = x_f32.astype(jnp.bfloat16)        # bf16 operand for the MXU

    # ---- conv1 (1x1) -> bn1 -> relu --------------------------------------
    h1 = jnp.dot(x_bf, w1_ref[...], preferred_element_type=jnp.float32)
    h1 = bn(h1, g1_ref[...], b1_ref[...], relu=True)

    # ---- conv2 (3x3, stride=1, pad=1) -> bn2 -> relu ----------------------
    # One unmasked full-buffer memset (replaces the 4 strided halo-ring
    # vst.msk writes), then a single interior write.
    pad_ref[...] = jnp.zeros((N, H + 2, W + 2, C), jnp.float32)
    pad_ref[:, 1:H + 1, 1:W + 1, :] = h1.reshape(N, H, W, C)
    # TODO(synk): keep the scratch f32 until packed-bf16 partial stores at an
    # odd sublane offset are verified in Mosaic; revisit with the gridded
    # version where the footprint actually matters.

    def tap(slab, ky, kx):
        # Static in-register window slice of the per-ky row slab (no extra
        # VMEM read), cast to bf16 at the MXU boundary.
        win = slab[:, :, kx:kx + W, :].reshape(NHW, C).astype(jnp.bfloat16)
        return jnp.dot(win, w2_ref[ky, kx], preferred_element_type=jnp.float32)

    # TODO(synk): fuse the taps into a per-ky K=3C dot or a full (NHW, 9C)
    # im2col single dot once unaligned lane concatenation is verified in
    # Mosaic; until then accumulate 9 bf16 MXU taps in f32.
    partials = []
    for ky in range(3):
        slab = pad_ref[:, ky:ky + H, :, :]   # one VMEM read per ky (3 total, was 9)
        partials.append(tap(slab, ky, 0) + tap(slab, ky, 1) + tap(slab, ky, 2))
    h2 = bn(partials[0] + partials[1] + partials[2],
            g2_ref[...], b2_ref[...], relu=True)

    # ---- conv3 (1x1) -> bn3 -> + identity -> relu -------------------------
    h3 = jnp.dot(h2.astype(jnp.bfloat16), w3_ref[...],
                 preferred_element_type=jnp.float32)
    h3 = bn(h3, g3_ref[...], b3_ref[...], relu=False)
    # Cexp = 128 lanes -> unmasked, lane-dense output store.
    o_ref[...] = jnp.maximum(h3 + x_f32, 0.0)


def _full_spec(shape):
    return pl.BlockSpec(shape, lambda: (0,) * len(shape))


def bottleneck_forward(x_nchw, w1, w2, w3, g1, b1, g2, b2, g3, b3):
    """x: NCHW (PyTorch layout). w1:(Cin,C), w2:(3,3,C,C) HWIO, w3:(C,Cexp)."""
    x = jnp.transpose(x_nchw, (0, 2, 3, 1)).astype(jnp.float32)   # NHWC
    N, H, W, Cin = x.shape
    C = w1.shape[1]
    Cexp = w3.shape[1]
    assert Cin == Cexp, "downsample=None requires in_channel == 4*out_channel"

    x2d = x.reshape(N * H * W, Cin)
    # bf16 weights for the MXU path (accumulation stays f32 in-kernel).
    w1b = w1.astype(jnp.bfloat16)
    w2b = w2.astype(jnp.bfloat16)
    w3b = w3.astype(jnp.bfloat16)
    args = (x2d, w1b, w2b, w3b, g1, b1, g2, b2, g3, b3)

    kernel = functools.partial(_bottleneck_kernel, N=N, H=H, W=W,
                               Cin=Cin, C=C, Cexp=Cexp)

    # vmem_limit_bytes deliberately omitted: total live data for this
    # single-block toy is < 1 MiB, far below the default scoped limit on
    # v5e/v6e/v7x.
    # TODO(synk): for production shapes, tile over batch/row blocks with a
    # 1-row halo, use a two-pass cross-tile reduction for the BN batch stats,
    # mark the tile axis "parallel" (2 TCs on v7x), and size vmem_limit_bytes
    # from the actual per-tile buffer bytes (x2 double-buffering) against
    # v7x's 64 MiB VMEM.
    out2d = pl.pallas_call(
        kernel,
        out_shape=jax.ShapeDtypeStruct((N * H * W, Cexp), jnp.float32),
        in_specs=[_full_spec(a.shape) for a in args],
        out_specs=_full_spec((N * H * W, Cexp)),
        scratch_shapes=[pltpu.VMEM((N, H + 2, W + 2, C), jnp.float32)],
    )(*args)

    out = out2d.reshape(N, H, W, Cexp)
    return jnp.transpose(out, (0, 3, 1, 2))                        # back to NCHW


def reference(x_nchw, w1, w2, w3, g1, b1, g2, b2, g3, b3):
    x = jnp.transpose(x_nchw, (0, 2, 3, 1)).astype(jnp.float32)

    def bn(y, g, b):
        mean = jnp.mean(y, axis=(0, 1, 2), keepdims=True)
        var = jnp.mean((y - mean) ** 2, axis=(0, 1, 2), keepdims=True)
        return ((y - mean) / jnp.sqrt(var + EPS)) * g.reshape(1, 1, 1, -1) \
            + b.reshape(1, 1, 1, -1)

    out = jnp.einsum('nhwc,cd->nhwd', x, w1)
    out = jax.nn.relu(bn(out, g1, b1))
    out = jax.lax.conv_general_dilated(
        out, w2, (1, 1), ((1, 1), (1, 1)),
        dimension_numbers=('NHWC', 'HWIO', 'NHWC'))
    out = jax.nn.relu(bn(out, g2, b2))
    out = jnp.einsum('nhwc,cd->nhwd', out, w3)
    out = bn(out, g3, b3)
    out = jax.nn.relu(out + x)
    return jnp.transpose(out, (0, 3, 1, 2))


if __name__ == "__main__":
    # out_channel C=32, expansion=4 -> Cexp=128; in_channel must equal Cexp
    # (=128) for downsample=None.  128 channels make the identity/output paths
    # lane-dense (full 128-lane vregs), per the perf review; batch=2, 8x8
    # spatial keeps the problem toy-sized (x is 64 KiB).
    C, Cin, Cexp = 32, 128, 128
    N, H, W = 2, 8, 8

    key = jax.random.PRNGKey(0)
    ks = jax.random.split(key, 10)

    # conv weights in matmul-friendly layouts: conv1 -> (Cin, C),
    # conv2 -> (3,3,C,C) (HWIO), conv3 -> (C, Cexp).
    w1 = 0.2 * jax.random.normal(ks[0], (Cin, C), jnp.float32)
    w2 = 0.2 * jax.random.normal(ks[1], (3, 3, C, C), jnp.float32)
    w3 = 0.2 * jax.random.normal(ks[2], (C, Cexp), jnp.float32)

    # BatchNorm affine params (gamma, beta), shaped (1, channels).
    g1 = 1.0 + 0.1 * jax.random.normal(ks[3], (1, C), jnp.float32)
    b1 = 0.1 * jax.random.normal(ks[4], (1, C), jnp.float32)
    g2 = 1.0 + 0.1 * jax.random.normal(ks[5], (1, C), jnp.float32)
    b2 = 0.1 * jax.random.normal(ks[6], (1, C), jnp.float32)
    g3 = 1.0 + 0.1 * jax.random.normal(ks[7], (1, Cexp), jnp.float32)
    b3 = 0.1 * jax.random.normal(ks[8], (1, Cexp), jnp.float32)

    x = jax.random.normal(ks[9], (N, Cin, H, W), jnp.float32)   # NCHW like PyTorch

    out = jax.block_until_ready(
        bottleneck_forward(x, w1, w2, w3, g1, b1, g2, b2, g3, b3))
    ref = jax.block_until_ready(
        reference(x, w1, w2, w3, g1, b1, g2, b2, g3, b3))

    # Tolerance sized for bf16 MXU inputs (K=128 conv1, 288-tap conv2
    # accumulations) vs. an all-f32 reference.
    np.testing.assert_allclose(np.asarray(out), np.asarray(ref),
                               rtol=2e-2, atol=8e-2)
    print("KERNEL_OK")
</pallas_src>

<mosaic_0001>
module attributes {stable_mosaic.version = 11 : i64} {
  func.func @_bottleneck_kernel(%arg0: memref<128x128xf32, #tpu.memory_space<vmem>>, %arg1: memref<128x32xbf16, #tpu.memory_space<vmem>>, %arg2: memref<3x3x32x32xbf16, #tpu.memory_space<vmem>>, %arg3: memref<32x128xbf16, #tpu.memory_space<vmem>>, %arg4: memref<1x32xf32, #tpu.memory_space<vmem>>, %arg5: memref<1x32xf32, #tpu.memory_space<vmem>>, %arg6: memref<1x32xf32, #tpu.memory_space<vmem>>, %arg7: memref<1x32xf32, #tpu.memory_space<vmem>>, %arg8: memref<1x128xf32, #tpu.memory_space<vmem>>, %arg9: memref<1x128xf32, #tpu.memory_space<vmem>>, %arg10: memref<128x128xf32, #tpu.memory_space<vmem>>, %arg11: memref<2x10x10x32xf32, #tpu.memory_space<vmem>>) attributes {dimension_semantics = [], scalar_prefetch = 0 : i64, scratch_operands = 1 : i64, tpu.core_type = #tpu.core_type<tc>} {
    %c0 = arith.constant 0 : index
    %c0_0 = arith.constant 0 : index
    %0 = vector.load %arg0[%c0, %c0_0] : memref<128x128xf32, #tpu.memory_space<vmem>>, vector<128x128xf32>
    %1 = arith.truncf %0 : vector<128x128xf32> to vector<128x128xbf16>
    %c0_1 = arith.constant 0 : index
    %c0_2 = arith.constant 0 : index
    %2 = vector.load %arg1[%c0_1, %c0_2] : memref<128x32xbf16, #tpu.memory_space<vmem>>, vector<128x32xbf16>
    %cst = arith.constant dense<0.000000e+00> : vector<128x32xf32>
    %3 = tpu.matmul %1, %2, %cst {dimension_numbers = #tpu.dot_dimension_numbers<[1], [0], [0], [1], [0, 0, 1, 1], [], []>} : vector<128x128xbf16>, vector<128x32xbf16>, vector<128x32xf32> -> vector<128x32xf32>
    %c0_3 = arith.constant 0 : index
    %c0_4 = arith.constant 0 : index
    %4 = vector.load %arg4[%c0_3, %c0_4] : memref<1x32xf32, #tpu.memory_space<vmem>>, vector<1x32xf32>
    %c0_5 = arith.constant 0 : index
    %c0_6 = arith.constant 0 : index
    %5 = vector.load %arg5[%c0_5, %c0_6] : memref<1x32xf32, #tpu.memory_space<vmem>>, vector<1x32xf32>
    %cst_7 = arith.constant dense<0.000000e+00> : vector<32xf32>
    %6 = vector.multi_reduction <add>, %3, %cst_7 [0] : vector<128x32xf32> to vector<32xf32>
    %7 = vector.shape_cast %6 : vector<32xf32> to vector<1x32xf32>
    %8 = arith.mulf %3, %3 : vector<128x32xf32>
    %cst_8 = arith.constant dense<0.000000e+00> : vector<32xf32>
    %9 = vector.multi_reduction <add>, %8, %cst_8 [0] : vector<128x32xf32> to vector<32xf32>
    %10 = vector.shape_cast %9 : vector<32xf32> to vector<1x32xf32>
    %cst_9 = arith.constant 7.812500e-03 : f32
    %11 = vector.broadcast %cst_9 : f32 to vector<1x32xf32>
    %12 = arith.mulf %7, %11 : vector<1x32xf32>
    %cst_10 = arith.constant 7.812500e-03 : f32
    %13 = vector.broadcast %cst_10 : f32 to vector<1x32xf32>
    %14 = arith.mulf %10, %13 : vector<1x32xf32>
    %15 = arith.mulf %12, %12 : vector<1x32xf32>
    %16 = arith.subf %14, %15 : vector<1x32xf32>
    %cst_11 = arith.constant 0.000000e+00 : f32
    %17 = vector.broadcast %cst_11 : f32 to vector<1x32xf32>
    %18 = arith.maximumf %16, %17 : vector<1x32xf32>
    %cst_12 = arith.constant 9.99999974E-6 : f32
    %19 = vector.broadcast %cst_12 : f32 to vector<1x32xf32>
    %20 = arith.addf %18, %19 : vector<1x32xf32>
    %21 = math.rsqrt %20 : vector<1x32xf32>
    %22 = arith.mulf %4, %21 : vector<1x32xf32>
    %23 = arith.mulf %12, %22 : vector<1x32xf32>
    %24 = arith.subf %5, %23 : vector<1x32xf32>
    %25 = vector.broadcast %22 : vector<1x32xf32> to vector<128x32xf32>
    %26 = arith.mulf %3, %25 : vector<128x32xf32>
    %27 = vector.broadcast %24 : vector<1x32xf32> to vector<128x32xf32>
    %28 = arith.addf %26, %27 : vector<128x32xf32>
    %cst_13 = arith.constant 0.000000e+00 : f32
    %29 = vector.broadcast %cst_13 : f32 to vector<128x32xf32>
    %30 = arith.maximumf %28, %29 : vector<128x32xf32>
    %cst_14 = arith.constant 0.000000e+00 : f32
    %31 = vector.broadcast %cst_14 : f32 to vector<2x10x10x32xf32>
    %c0_15 = arith.constant 0 : index
    %c0_16 = arith.constant 0 : index
    %c0_17 = arith.constant 0 : index
    %c0_18 = arith.constant 0 : index
    %32 = vector.load %arg11[%c0_15, %c0_16, %c0_17, %c0_18] : memref<2x10x10x32xf32, #tpu.memory_space<vmem>>, vector<2x10x10x32xf32>
    tpu.vector_store %arg11[%c0_15, %c0_16, %c0_17, %c0_18], %31 {strides = array<i32>} : memref<2x10x10x32xf32, #tpu.memory_space<vmem>>, vector<2x10x10x32xf32>,
    %33 = vector.shape_cast %30 : vector<128x32xf32> to vector<2x8x8x32xf32>
    %c0_19 = arith.constant 0 : index
    %c1 = arith.constant 1 : index
    %c1_20 = arith.constant 1 : index
    %c0_21 = arith.constant 0 : index
    %34 = vector.load %arg11[%c0_19, %c1, %c1_20, %c0_21] : memref<2x10x10x32xf32, #tpu.memory_space<vmem>>, vector<2x8x8x32xf32>
    tpu.vector_store %arg11[%c0_19, %c1, %c1_20, %c0_21], %33 {strides = array<i32>} : memref<2x10x10x32xf32, #tpu.memory_space<vmem>>, vector<2x8x8x32xf32>,
    %c0_22 = arith.constant 0 : index
    %c0_23 = arith.constant 0 : index
    %c0_24 = arith.constant 0 : index
    %c0_25 = arith.constant 0 : index
    %35 = vector.load %arg11[%c0_22, %c0_23, %c0_24, %c0_25] : memref<2x10x10x32xf32, #tpu.memory_space<vmem>>, vector<2x8x10x32xf32>
    %36 = vector.extract_strided_slice %35 {offsets = [0, 0, 0, 0], sizes = [2, 8, 8, 32], strides = [1, 1, 1, 1]} : vector<2x8x10x32xf32> to vector<2x8x8x32xf32>
    %37 = vector.shape_cast %36 : vector<2x8x8x32xf32> to vector<128x32xf32>
    %38 = arith.truncf %37 : vector<128x32xf32> to vector<128x32xbf16>
    %c0_26 = arith.constant 0 : index
    %c0_27 = arith.constant 0 : index
    %c0_28 = arith.constant 0 : index
    %c0_29 = arith.constant 0 : index
    %39 = vector.load %arg2[%c0_26, %c0_27, %c0_28, %c0_29] : memref<3x3x32x32xbf16, #tpu.memory_space<vmem>>, vector<1x1x32x32xbf16>
    %40 = vector.shape_cast %39 : vector<1x1x32x32xbf16> to vector<32x32xbf16>
    %cst_30 = arith.constant dense<0.000000e+00> : vector<128x32xf32>
    %41 = tpu.matmul %38, %40, %cst_30 {dimension_numbers = #tpu.dot_dimension_numbers<[1], [0], [0], [1], [0, 0, 1, 1], [], []>} : vector<128x32xbf16>, vector<32x32xbf16>, vector<128x32xf32> -> vector<128x32xf32>
    %42 = vector.extract_strided_slice %35 {offsets = [0, 0, 1, 0], sizes = [2, 8, 8, 32], strides = [1, 1, 1, 1]} : vector<2x8x10x32xf32> to vector<2x8x8x32xf32>
    %43 = vector.shape_cast %42 : vector<2x8x8x32xf32> to vector<128x32xf32>
    %44 = arith.truncf %43 : vector<128x32xf32> to vector<128x32xbf16>
    %c0_31 = arith.constant 0 : index
    %c1_32 = arith.constant 1 : index
    %c0_33 = arith.constant 0 : index
    %c0_34 = arith.constant 0 : index
    %45 = vector.load %arg2[%c0_31, %c1_32, %c0_33, %c0_34] : memref<3x3x32x32xbf16, #tpu.memory_space<vmem>>, vector<1x1x32x32xbf16>
    %46 = vector.shape_cast %45 : vector<1x1x32x32xbf16> to vector<32x32xbf16>
    %cst_35 = arith.constant dense<0.000000e+00> : vector<128x32xf32>
    %47 = tpu.matmul %44, %46, %cst_35 {dimension_numbers = #tpu.dot_dimension_numbers<[1], [0], [0], [1], [0, 0, 1, 1], [], []>} : vector<128x32xbf16>, vector<32x32xbf16>, vector<128x32xf32> -> vector<128x32xf32>
    %48 = arith.addf %41, %47 : vector<128x32xf32>
    %49 = vector.extract_strided_slice %35 {offsets = [0, 0, 2, 0], sizes = [2, 8, 8, 32], strides = [1, 1, 1, 1]} : vector<2x8x10x32xf32> to vector<2x8x8x32xf32>
    %50 = vector.shape_cast %49 : vector<2x8x8x32xf32> to vector<128x32xf32>
    %51 = arith.truncf %50 : vector<128x32xf32> to vector<128x32xbf16>
    %c0_36 = arith.constant 0 : index
    %c2 = arith.constant 2 : index
    %c0_37 = arith.constant 0 : index
    %c0_38 = arith.constant 0 : index
    %52 = vector.load %arg2[%c0_36, %c2, %c0_37, %c0_38] : memref<3x3x32x32xbf16, #tpu.memory_space<vmem>>, vector<1x1x32x32xbf16>
    %53 = vector.shape_cast %52 : vector<1x1x32x32xbf16> to vector<32x32xbf16>
    %cst_39 = arith.constant dense<0.000000e+00> : vector<128x32xf32>
    %54 = tpu.matmul %51, %53, %cst_39 {dimension_numbers = #tpu.dot_dimension_numbers<[1], [0], [0], [1], [0, 0, 1, 1], [], []>} : vector<128x32xbf16>, vector<32x32xbf16>, vector<128x32xf32> -> vector<128x32xf32>
    %55 = arith.addf %48, %54 : vector<128x32xf32>
    %c0_40 = arith.constant 0 : index
    %c1_41 = arith.constant 1 : index
    %c0_42 = arith.constant 0 : index
    %c0_43 = arith.constant 0 : index
    %56 = vector.load %arg11[%c0_40, %c1_41, %c0_42, %c0_43] : memref<2x10x10x32xf32, #tpu.memory_space<vmem>>, vector<2x8x10x32xf32>
    %57 = vector.extract_strided_slice %56 {offsets = [0, 0, 0, 0], sizes = [2, 8, 8, 32], strides = [1, 1, 1, 1]} : vector<2x8x10x32xf32> to vector<2x8x8x32xf32>
    %58 = vector.shape_cast %57 : vector<2x8x8x32xf32> to vector<128x32xf32>
    %59 = arith.truncf %58 : vector<128x32xf32> to vector<128x32xbf16>
    %c1_44 = arith.constant 1 : index
    %c0_45 = arith.constant 0 : index
    %c0_46 = arith.constant 0 : index
    %c0_47 = arith.constant 0 : index
    %60 = vector.load %arg2[%c1_44, %c0_45, %c0_46, %c0_47] : memref<3x3x32x32xbf16, #tpu.memory_space<vmem>>, vector<1x1x32x32xbf16>
    %61 = vector.shape_cast %60 : vector<1x1x32x32xbf16> to vector<32x32xbf16>
    %cst_48 = arith.constant dense<0.000000e+00> : vector<128x32xf32>
    %62 = tpu.matmul %59, %61, %cst_48 {dimension_numbers = #tpu.dot_dimension_numbers<[1], [0], [0], [1], [0, 0, 1, 1], [], []>} : vector<128x32xbf16>, vector<32x32xbf16>, vector<128x32xf32> -> vector<128x32xf32>
    %63 = vector.extract_strided_slice %56 {offsets = [0, 0, 1, 0], sizes = [2, 8, 8, 32], strides = [1, 1, 1, 1]} : vector<2x8x10x32xf32> to vector<2x8x8x32xf32>
    %64 = vector.shape_cast %63 : vector<2x8x8x32xf32> to vector<128x32xf32>
    %65 = arith.truncf %64 : vector<128x32xf32> to vector<128x32xbf16>
    %c1_49 = arith.constant 1 : index
    %c1_50 = arith.constant 1 : index
    %c0_51 = arith.constant 0 : index
    %c0_52 = arith.constant 0 : index
    %66 = vector.load %arg2[%c1_49, %c1_50, %c0_51, %c0_52] : memref<3x3x32x32xbf16, #tpu.memory_space<vmem>>, vector<1x1x32x32xbf16>
    %67 = vector.shape_cast %66 : vector<1x1x32x32xbf16> to vector<32x32xbf16>
    %cst_53 = arith.constant dense<0.000000e+00> : vector<128x32xf32>
    %68 = tpu.matmul %65, %67, %cst_53 {dimension_numbers = #tpu.dot_dimension_numbers<[1], [0], [0], [1], [0, 0, 1, 1], [], []>} : vector<128x32xbf16>, vector<32x32xbf16>, vector<128x32xf32> -> vector<128x32xf32>
    %69 = arith.addf %62, %68 : vector<128x32xf32>
    %70 = vector.extract_strided_slice %56 {offsets = [0, 0, 2, 0], sizes = [2, 8, 8, 32], strides = [1, 1, 1, 1]} : vector<2x8x10x32xf32> to vector<2x8x8x32xf32>
    %71 = vector.shape_cast %70 : vector<2x8x8x32xf32> to vector<128x32xf32>
    %72 = arith.truncf %71 : vector<128x32xf32> to vector<128x32xbf16>
    %c1_54 = arith.constant 1 : index
    %c2_55 = arith.constant 2 : index
    %c0_56 = arith.constant 0 : index
    %c0_57 = arith.constant 0 : index
    %73 = vector.load %arg2[%c1_54, %c2_55, %c0_56, %c0_57] : memref<3x3x32x32xbf16, #tpu.memory_space<vmem>>, vector<1x1x32x32xbf16>
    %74 = vector.shape_cast %73 : vector<1x1x32x32xbf16> to vector<32x32xbf16>
    %cst_58 = arith.constant dense<0.000000e+00> : vector<128x32xf32>
    %75 = tpu.matmul %72, %74, %cst_58 {dimension_numbers = #tpu.dot_dimension_numbers<[1], [0], [0], [1], [0, 0, 1, 1], [], []>} : vector<128x32xbf16>, vector<32x32xbf16>, vector<128x32xf32> -> vector<128x32xf32>
    %76 = arith.addf %69, %75 : vector<128x32xf32>
    %c0_59 = arith.constant 0 : index
    %c2_60 = arith.constant 2 : index
    %c0_61 = arith.constant 0 : index
    %c0_62 = arith.constant 0 : index
    %77 = vector.load %arg11[%c0_59, %c2_60, %c0_61, %c0_62] : memref<2x10x10x32xf32, #tpu.memory_space<vmem>>, vector<2x8x10x32xf32>
    %78 = vector.extract_strided_slice %77 {offsets = [0, 0, 0, 0], sizes = [2, 8, 8, 32], strides = [1, 1, 1, 1]} : vector<2x8x10x32xf32> to vector<2x8x8x32xf32>
    %79 = vector.shape_cast %78 : vector<2x8x8x32xf32> to vector<128x32xf32>
    %80 = arith.truncf %79 : vector<128x32xf32> to vector<128x32xbf16>
    %c2_63 = arith.constant 2 : index
    %c0_64 = arith.constant 0 : index
    %c0_65 = arith.constant 0 : index
    %c0_66 = arith.constant 0 : index
    %81 = vector.load %arg2[%c2_63, %c0_64, %c0_65, %c0_66] : memref<3x3x32x32xbf16, #tpu.memory_space<vmem>>, vector<1x1x32x32xbf16>
    %82 = vector.shape_cast %81 : vector<1x1x32x32xbf16> to vector<32x32xbf16>
    %cst_67 = arith.constant dense<0.000000e+00> : vector<128x32xf32>
    %83 = tpu.matmul %80, %82, %cst_67 {dimension_numbers = #tpu.dot_dimension_numbers<[1], [0], [0], [1], [0, 0, 1, 1], [], []>} : vector<128x32xbf16>, vector<32x32xbf16>, vector<128x32xf32> -> vector<128x32xf32>
    %84 = vector.extract_strided_slice %77 {offsets = [0, 0, 1, 0], sizes = [2, 8, 8, 32], strides = [1, 1, 1, 1]} : vector<2x8x10x32xf32> to vector<2x8x8x32xf32>
    %85 = vector.shape_cast %84 : vector<2x8x8x32xf32> to vector<128x32xf32>
    %86 = arith.truncf %85 : vector<128x32xf32> to vector<128x32xbf16>
    %c2_68 = arith.constant 2 : index
    %c1_69 = arith.constant 1 : index
    %c0_70 = arith.constant 0 : index
    %c0_71 = arith.constant 0 : index
    %87 = vector.load %arg2[%c2_68, %c1_69, %c0_70, %c0_71] : memref<3x3x32x32xbf16, #tpu.memory_space<vmem>>, vector<1x1x32x32xbf16>
    %88 = vector.shape_cast %87 : vector<1x1x32x32xbf16> to vector<32x32xbf16>
    %cst_72 = arith.constant dense<0.000000e+00> : vector<128x32xf32>
    %89 = tpu.matmul %86, %88, %cst_72 {dimension_numbers = #tpu.dot_dimension_numbers<[1], [0], [0], [1], [0, 0, 1, 1], [], []>} : vector<128x32xbf16>, vector<32x32xbf16>, vector<128x32xf32> -> vector<128x32xf32>
    %90 = arith.addf %83, %89 : vector<128x32xf32>
    %91 = vector.extract_strided_slice %77 {offsets = [0, 0, 2, 0], sizes = [2, 8, 8, 32], strides = [1, 1, 1, 1]} : vector<2x8x10x32xf32> to vector<2x8x8x32xf32>
    %92 = vector.shape_cast %91 : vector<2x8x8x32xf32> to vector<128x32xf32>
    %93 = arith.truncf %92 : vector<128x32xf32> to vector<128x32xbf16>
    %c2_73 = arith.constant 2 : index
    %c2_74 = arith.constant 2 : index
    %c0_75 = arith.constant 0 : index
    %c0_76 = arith.constant 0 : index
    %94 = vector.load %arg2[%c2_73, %c2_74, %c0_75, %c0_76] : memref<3x3x32x32xbf16, #tpu.memory_space<vmem>>, vector<1x1x32x32xbf16>
    %95 = vector.shape_cast %94 : vector<1x1x32x32xbf16> to vector<32x32xbf16>
    %cst_77 = arith.constant dense<0.000000e+00> : vector<128x32xf32>
    %96 = tpu.matmul %93, %95, %cst_77 {dimension_numbers = #tpu.dot_dimension_numbers<[1], [0], [0], [1], [0, 0, 1, 1], [], []>} : vector<128x32xbf16>, vector<32x32xbf16>, vector<128x32xf32> -> vector<128x32xf32>
    %97 = arith.addf %90, %96 : vector<128x32xf32>
    %98 = arith.addf %55, %76 : vector<128x32xf32>
    %99 = arith.addf %98, %97 : vector<128x32xf32>
    %c0_78 = arith.constant 0 : index
    %c0_79 = arith.constant 0 : index
    %100 = vector.load %arg6[%c0_78, %c0_79] : memref<1x32xf32, #tpu.memory_space<vmem>>, vector<1x32xf32>
    %c0_80 = arith.constant 0 : index
    %c0_81 = arith.constant 0 : index
    %101 = vector.load %arg7[%c0_80, %c0_81] : memref<1x32xf32, #tpu.memory_space<vmem>>, vector<1x32xf32>
    %cst_82 = arith.constant dense<0.000000e+00> : vector<32xf32>
    %102 = vector.multi_reduction <add>, %99, %cst_82 [0] : vector<128x32xf32> to vector<32xf32>
    %103 = vector.shape_cast %102 : vector<32xf32> to vector<1x32xf32>
    %104 = arith.mulf %99, %99 : vector<128x32xf32>
    %cst_83 = arith.constant dense<0.000000e+00> : vector<32xf32>
    %105 = vector.multi_reduction <add>, %104, %cst_83 [0] : vector<128x32xf32> to vector<32xf32>
    %106 = vector.shape_cast %105 : vector<32xf32> to vector<1x32xf32>
    %cst_84 = arith.constant 7.812500e-03 : f32
    %107 = vector.broadcast %cst_84 : f32 to vector<1x32xf32>
    %108 = arith.mulf %103, %107 : vector<1x32xf32>
    %cst_85 = arith.constant 7.812500e-03 : f32
    %109 = vector.broadcast %cst_85 : f32 to vector<1x32xf32>
    %110 = arith.mulf %106, %109 : vector<1x32xf32>
    %111 = arith.mulf %108, %108 : vector<1x32xf32>
    %112 = arith.subf %110, %111 : vector<1x32xf32>
    %cst_86 = arith.constant 0.000000e+00 : f32
    %113 = vector.broadcast %cst_86 : f32 to vector<1x32xf32>
    %114 = arith.maximumf %112, %113 : vector<1x32xf32>
    %cst_87 = arith.constant 9.99999974E-6 : f32
    %115 = vector.broadcast %cst_87 : f32 to vector<1x32xf32>
    %116 = arith.addf %114, %115 : vector<1x32xf32>
    %117 = math.rsqrt %116 : vector<1x32xf32>
    %118 = arith.mulf %100, %117 : vector<1x32xf32>
    %119 = arith.mulf %108, %118 : vector<1x32xf32>
    %120 = arith.subf %101, %119 : vector<1x32xf32>
    %121 = vector.broadcast %118 : vector<1x32xf32> to vector<128x32xf32>
    %122 = arith.mulf %99, %121 : vector<128x32xf32>
    %123 = vector.broadcast %120 : vector<1x32xf32> to vector<128x32xf32>
    %124 = arith.addf %122, %123 : vector<128x32xf32>
    %cst_88 = arith.constant 0.000000e+00 : f32
    %125 = vector.broadcast %cst_88 : f32 to vector<128x32xf32>
    %126 = arith.maximumf %124, %125 : vector<128x32xf32>
    %127 = arith.truncf %126 : vector<128x32xf32> to vector<128x32xbf16>
    %c0_89 = arith.constant 0 : index
    %c0_90 = arith.constant 0 : index
    %128 = vector.load %arg3[%c0_89, %c0_90] : memref<32x128xbf16, #tpu.memory_space<vmem>>, vector<32x128xbf16>
    %cst_91 = arith.constant dense<0.000000e+00> : vector<128x128xf32>
    %129 = tpu.matmul %127, %128, %cst_91 {dimension_numbers = #tpu.dot_dimension_numbers<[1], [0], [0], [1], [0, 0, 1, 1], [], []>} : vector<128x32xbf16>, vector<32x128xbf16>, vector<128x128xf32> -> vector<128x128xf32>
    %c0_92 = arith.constant 0 : index
    %c0_93 = arith.constant 0 : index
    %130 = vector.load %arg8[%c0_92, %c0_93] : memref<1x128xf32, #tpu.memory_space<vmem>>, vector<1x128xf32>
    %c0_94 = arith.constant 0 : index
    %c0_95 = arith.constant 0 : index
    %131 = vector.load %arg9[%c0_94, %c0_95] : memref<1x128xf32, #tpu.memory_space<vmem>>, vector<1x128xf32>
    %cst_96 = arith.constant dense<0.000000e+00> : vector<128xf32>
    %132 = vector.multi_reduction <add>, %129, %cst_96 [0] : vector<128x128xf32> to vector<128xf32>
    %133 = vector.shape_cast %132 : vector<128xf32> to vector<1x128xf32>
    %134 = arith.mulf %129, %129 : vector<128x128xf32>
    %cst_97 = arith.constant dense<0.000000e+00> : vector<128xf32>
    %135 = vector.multi_reduction <add>, %134, %cst_97 [0] : vector<128x128xf32> to vector<128xf32>
    %136 = vector.shape_cast %135 : vector<128xf32> to vector<1x128xf32>
    %cst_98 = arith.constant 7.812500e-03 : f32
    %137 = vector.broadcast %cst_98 : f32 to vector<1x128xf32>
    %138 = arith.mulf %133, %137 : vector<1x128xf32>
    %cst_99 = arith.constant 7.812500e-03 : f32
    %139 = vector.broadcast %cst_99 : f32 to vector<1x128xf32>
    %140 = arith.mulf %136, %139 : vector<1x128xf32>
    %141 = arith.mulf %138, %138 : vector<1x128xf32>
    %142 = arith.subf %140, %141 : vector<1x128xf32>
    %cst_100 = arith.constant 0.000000e+00 : f32
    %143 = vector.broadcast %cst_100 : f32 to vector<1x128xf32>
    %144 = arith.maximumf %142, %143 : vector<1x128xf32>
    %cst_101 = arith.constant 9.99999974E-6 : f32
    %145 = vector.broadcast %cst_101 : f32 to vector<1x128xf32>
    %146 = arith.addf %144, %145 : vector<1x128xf32>
    %147 = math.rsqrt %146 : vector<1x128xf32>
    %148 = arith.mulf %130, %147 : vector<1x128xf32>
    %149 = arith.mulf %138, %148 : vector<1x128xf32>
    %150 = arith.subf %131, %149 : vector<1x128xf32>
    %151 = vector.broadcast %148 : vector<1x128xf32> to vector<128x128xf32>
    %152 = arith.mulf %129, %151 : vector<128x128xf32>
    %153 = vector.broadcast %150 : vector<1x128xf32> to vector<128x128xf32>
    %154 = arith.addf %152, %153 : vector<128x128xf32>
    %155 = arith.addf %154, %0 : vector<128x128xf32>
    %cst_102 = arith.constant 0.000000e+00 : f32
    %156 = vector.broadcast %cst_102 : f32 to vector<128x128xf32>
    %157 = arith.maximumf %155, %156 : vector<128x128xf32>
    %c0_103 = arith.constant 0 : index
    %c0_104 = arith.constant 0 : index
    %158 = vector.load %arg10[%c0_103, %c0_104] : memref<128x128xf32, #tpu.memory_space<vmem>>, vector<128x128xf32>
    tpu.vector_store %arg10[%c0_103, %c0_104], %157 {strides = array<i32>} : memref<128x128xf32, #tpu.memory_space<vmem>>, vector<128x128xf32>,
    return
  }
}

</mosaic_0001>

<llo_original>
// kernel: tpu_custom_call.1
$region0: #{tpu_custom_call.1}
  #allocation0 [shape = 'u32[]', space=smem, size = 0x4, offset = 0x4, fixed_abs, tag = 'smem constant byte address 0x4 - core index']
  #allocation1 [shape = 'u32[144,128]{1,0:T(1,128)}', space=vmem, size = 0x12000, scoped, tag = 'internal scratch']
  #allocation2 [shape = 'f32[2,10,10,32]{3,2,1,0:T(8,128)}', space=vmem, size = 0x28000, scoped, tag = 'scratch operand']
  %s0 = inlined_call_operand.hbm [shape: f32[128,128], index: 0, kind: input, shape index: {}]
  %s1 = inlined_call_operand.vmem [shape: bf16[128,32], index: 1, kind: input, shape index: {}]
  %s2 = inlined_call_operand.hbm [shape: bf16[3,3,32,32], index: 2, kind: input, shape index: {}]
  %s3 = inlined_call_operand.vmem [shape: bf16[32,128], index: 3, kind: input, shape index: {}]
  %s4 = inlined_call_operand.vmem [shape: f32[1,32], index: 4, kind: input, shape index: {}]
  %s5 = inlined_call_operand.vmem [shape: f32[1,32], index: 5, kind: input, shape index: {}]
  %s6 = inlined_call_operand.vmem [shape: f32[1,32], index: 6, kind: input, shape index: {}]
  %s7 = inlined_call_operand.vmem [shape: f32[1,32], index: 7, kind: input, shape index: {}]
  %s8 = inlined_call_operand.vmem [shape: f32[1,128], index: 8, kind: input, shape index: {}]
  %s9 = inlined_call_operand.vmem [shape: f32[1,128], index: 9, kind: input, shape index: {}]
  %s10 = inlined_call_operand.hbm [shape: f32[128,128], index: 10, kind: output, shape index: {}]
  %s11 = sld [smem:[#allocation0]]
  $region58: #{tpu_custom_call.1} parent=0
    _
  %s13 = ssub.s32 1, %s11
  %s14 = scalar_select 0, %s13, %s11
  $region1: #{tpu_custom_call.1} parent=0
    #allocation3 [shape = 'u8[65536]{0}', space=vmem, size = 0x10000, scoped, tag = 'input window, operand 0, single buffered']
    #allocation4 [shape = 's32[1]{0}', space=sflag, size = 0x4, scoped, tag = 'scoped memory for tpu_custom_call.1']
    #allocation5 [shape = 's32[1]{0}', space=sflag, size = 0x4, scoped, tag = 'scoped memory for tpu_custom_call.1']
    #allocation6 [shape = 'u8[73728]{0}', space=vmem, size = 0x12000, scoped, tag = 'input window, operand 2, single buffered']
    #allocation7 [shape = 's32[1]{0}', space=sflag, size = 0x4, scoped, tag = 'scoped memory for tpu_custom_call.1']
    #allocation8 [shape = 'u8[65536]{0}', space=vmem, size = 0x10000, scoped, tag = 'output window, operand 0, single buffered']
    %15 = vsyncpa [#allocation4], 0
    %16 = vsyncpa [#allocation7], 0
    %17 = vsyncpa [#allocation5], 0
    // Predicated region
    $region2: #{tpu_custom_call.1} parent=1 // pred_check
      _
    $region3: #{tpu_custom_call.1} parent=1 // pred_check_branch
      %19 = sbr.rel (0) target = $region5
    $region4: #{tpu_custom_call.1} parent=1 // pred_region
      %s21 = ssub.s32 2048, 2048
      %22 = vsyncadd [#allocation4], %s21
      %s23 = sshll.u32 [#allocation3], 4
      %s24 = int_to_ptr.vmem [resolvable:$true] %s23
      %29 = dma.hbm_to_vmem [thread:$0]  %s0, 2048, %s24, [#allocation4], 128, 128, 8
    $region5: #{tpu_custom_call.1} parent=1 // pred_fallthru
      _
    // Predicated region
    $region6: #{tpu_custom_call.1} parent=1 // pred_check
      _
    $region7: #{tpu_custom_call.1} parent=1 // pred_check_branch
      %31 = sbr.rel (0) target = $region9
    $region8: #{tpu_custom_call.1} parent=1 // pred_region
      _
    $region9: #{tpu_custom_call.1} parent=1 // pred_fallthru
      _
    // Predicated region
    $region10: #{tpu_custom_call.1} parent=1 // pred_check
      _
    $region11: #{tpu_custom_call.1} parent=1 // pred_check_branch
      %33 = sbr.rel (0) target = $region13
    $region12: #{tpu_custom_call.1} parent=1 // pred_region
      %s35 = ssub.s32 2304, 2304
      %36 = vsyncadd [#allocation7], %s35
      %s37 = sshll.u32 [#allocation6], 4
      %s38 = int_to_ptr.vmem [resolvable:$true] %s37
      %43 = dma.hbm_to_vmem [thread:$0]  %s2, 2304, %s38, [#allocation7], 64, 64, 4
    $region13: #{tpu_custom_call.1} parent=1 // pred_fallthru
      _
    // Predicated region
    $region14: #{tpu_custom_call.1} parent=1 // pred_check
      _
    $region15: #{tpu_custom_call.1} parent=1 // pred_check_branch
      %45 = sbr.rel (0) target = $region17
    $region16: #{tpu_custom_call.1} parent=1 // pred_region
      _
    $region17: #{tpu_custom_call.1} parent=1 // pred_fallthru
      _
    // Predicated region
    $region18: #{tpu_custom_call.1} parent=1 // pred_check
      _
    $region19: #{tpu_custom_call.1} parent=1 // pred_check_branch
      %47 = sbr.rel (0) target = $region21
    $region20: #{tpu_custom_call.1} parent=1 // pred_region
      _
    $region21: #{tpu_custom_call.1} parent=1 // pred_fallthru
      _
    // Predicated region
    $region22: #{tpu_custom_call.1} parent=1 // pred_check
      _
    $region23: #{tpu_custom_call.1} parent=1 // pred_check_branch
      %49 = sbr.rel (0) target = $region25
    $region24: #{tpu_custom_call.1} parent=1 // pred_region
      _
    $region25: #{tpu_custom_call.1} parent=1 // pred_fallthru
      _
    // Predicated region
    $region26: #{tpu_custom_call.1} parent=1 // pred_check
      _
    $region27: #{tpu_custom_call.1} parent=1 // pred_check_branch
      %51 = sbr.rel (0) target = $region29
    $region28: #{tpu_custom_call.1} parent=1 // pred_region
      _
    $region29: #{tpu_custom_call.1} parent=1 // pred_fallthru
      _
    // Predicated region
    $region30: #{tpu_custom_call.1} parent=1 // pred_check
      _
    $region31: #{tpu_custom_call.1} parent=1 // pred_check_branch
      %53 = sbr.rel (0) target = $region33
    $region32: #{tpu_custom_call.1} parent=1 // pred_region
      _
    $region33: #{tpu_custom_call.1} parent=1 // pred_fallthru
      _
    // Predicated region
    $region34: #{tpu_custom_call.1} parent=1 // pred_check
      _
    $region35: #{tpu_custom_call.1} parent=1 // pred_check_branch
      %55 = sbr.rel (0) target = $region37
    $region36: #{tpu_custom_call.1} parent=1 // pred_region
      _
    $region37: #{tpu_custom_call.1} parent=1 // pred_fallthru
      _
    // Predicated region
    $region38: #{tpu_custom_call.1} parent=1 // pred_check
      _
    $region39: #{tpu_custom_call.1} parent=1 // pred_check_branch
      %57 = sbr.rel (0) target = $region41
    $region40: #{tpu_custom_call.1} parent=1 // pred_region
      _
    $region41: #{tpu_custom_call.1} parent=1 // pred_fallthru
      _
    // Predicated region
    $region42: #{tpu_custom_call.1} parent=1 // pred_check
      _
    $region43: #{tpu_custom_call.1} parent=1 // pred_check_branch
      %59 = sbr.rel (0) target = $region45
    $region44: #{tpu_custom_call.1} parent=1 // pred_region
      %60 = dma.done [#allocation4], 2048
    $region45: #{tpu_custom_call.1} parent=1 // pred_fallthru
      _
    // Predicated region
    $region46: #{tpu_custom_call.1} parent=1 // pred_check
      _
    $region47: #{tpu_custom_call.1} parent=1 // pred_check_branch
      %62 = sbr.rel (0) target = $region49
    $region48: #{tpu_custom_call.1} parent=1 // pred_region
      %63 = dma.done [#allocation7], 2304
    $region49: #{tpu_custom_call.1} parent=1 // pred_fallthru
      _
    %v65 = vld [vmem:[#allocation3] sm:$0xff]
    %v66 = vld [vmem:[#allocation3 + $0x8] sm:$0xff]
    %v67 = vld [vmem:[#allocation3 + $0x10] sm:$0xff]
    %v68 = vld [vmem:[#allocation3 + $0x18] sm:$0xff]
    %v69 = vld [vmem:[#allocation3 + $0x20] sm:$0xff]
    %v70 = vld [vmem:[#allocation3 + $0x28] sm:$0xff]
    %v71 = vld [vmem:[#allocation3 + $0x30] sm:$0xff]
    %v72 = vld [vmem:[#allocation3 + $0x38] sm:$0xff]
    %v73 = vld [vmem:[#allocation3 + $0x40] sm:$0xff]
    %v74 = vld [vmem:[#allocation3 + $0x48] sm:$0xff]
    %v75 = vld [vmem:[#allocation3 + $0x50] sm:$0xff]
    %v76 = vld [vmem:[#allocation3 + $0x58] sm:$0xff]
    %v77 = vld [vmem:[#allocation3 + $0x60] sm:$0xff]
    %v78 = vld [vmem:[#allocation3 + $0x68] sm:$0xff]
    %v79 = vld [vmem:[#allocation3 + $0x70] sm:$0xff]
    %v80 = vld [vmem:[#allocation3 + $0x78] sm:$0xff]
    %v81 = vpack.c.bf16 %v66, %v65
    %v82 = vpack.c.bf16 %v68, %v67
    %v83 = vpack.c.bf16 %v70, %v69
    %v84 = vpack.c.bf16 %v72, %v71
    %v85 = vpack.c.bf16 %v74, %v73
    %v86 = vpack.c.bf16 %v76, %v75
    %v87 = vpack.c.bf16 %v78, %v77
    %v88 = vpack.c.bf16 %v80, %v79
    %v89 = vld [vmem:[%s1] sm:$0xf]
    %v90 = vld [vmem:[%s1 + $0x4] sm:$0xf]
    %v91 = vld [vmem:[%s1 + $0x8] sm:$0xf]
    %v92 = vld [vmem:[%s1 + $0xc] sm:$0xf]
    %v93 = vld [vmem:[%s1 + $0x10] sm:$0xf]
    %v94 = vld [vmem:[%s1 + $0x14] sm:$0xf]
    %v95 = vld [vmem:[%s1 + $0x18] sm:$0xf]
    %v96 = vld [vmem:[%s1 + $0x1c] sm:$0xf]
    %v97 = vld [vmem:[%s1 + $0x20] sm:$0xf]
    %v98 = vld [vmem:[%s1 + $0x24] sm:$0xf]
    %v99 = vld [vmem:[%s1 + $0x28] sm:$0xf]
    %v100 = vld [vmem:[%s1 + $0x2c] sm:$0xf]
    %v101 = vld [vmem:[%s1 + $0x30] sm:$0xf]
    %v102 = vld [vmem:[%s1 + $0x34] sm:$0xf]
    %v103 = vld [vmem:[%s1 + $0x38] sm:$0xf]
    %v104 = vld [vmem:[%s1 + $0x3c] sm:$0xf]
    %v121 = vunpack.c.l.b16 %v89
    %v122 = vunpack.c.l.b16 %v90
    %v123 = vunpack.c.l.b16 %v91
    %v124 = vunpack.c.l.b16 %v92
    %v125 = vunpack.c.l.b16 %v93
    %v126 = vunpack.c.l.b16 %v94
    %v127 = vunpack.c.l.b16 %v95
    %v128 = vunpack.c.l.b16 %v96
    %v129 = vunpack.c.l.b16 %v97
    %v130 = vunpack.c.l.b16 %v98
    %v131 = vunpack.c.l.b16 %v99
    %v132 = vunpack.c.l.b16 %v100
    %v133 = vunpack.c.l.b16 %v101
    %v134 = vunpack.c.l.b16 %v102
    %v135 = vunpack.c.l.b16 %v103
    %v136 = vunpack.c.l.b16 %v104
    %v137 = vpack.c.b16 %v122, %v121
    %v138 = vpack.c.b16 %v124, %v123
    %v139 = vpack.c.b16 %v126, %v125
    %v140 = vpack.c.b16 %v128, %v127
    %v141 = vpack.c.b16 %v130, %v129
    %v142 = vpack.c.b16 %v132, %v131
    %v143 = vpack.c.b16 %v134, %v133
    %v144 = vpack.c.b16 %v136, %v135
    %153 = vmatprep.subr.bf16.mxu0 0
    %154 = vmatpush1.bf16.msra.mxu0 %v137
    %155 = vmatprep.subr.bf16.mxu0 0
    %156 = vmatpush1.bf16.msra.mxu0 %v138
    %157 = vmatprep.subr.bf16.mxu0 0
    %158 = vmatpush1.bf16.msra.mxu0 %v139
    %159 = vmatprep.subr.bf16.mxu0 0
    %160 = vmatpush1.bf16.msra.mxu0 %v140
    %161 = vmatprep.subr.bf16.mxu0 0
    %162 = vmatpush1.bf16.msra.mxu0 %v141
    %163 = vmatprep.subr.bf16.mxu0 0
    %164 = vmatpush1.bf16.msra.mxu0 %v142
    %165 = vmatprep.subr.bf16.mxu0 0
    %166 = vmatpush1.bf16.msra.mxu0 %v143
    %167 = vmatprep.subr.bf16.mxu0 0
    %168 = vmatpush1.bf16.msra.mxu0 %v144
    %169 = vmatprep.subr.bf16.mxu0 0
    %170 = vmatpush1.bf16.msra.mxu0 0
    %171 = vmatprep.subr.bf16.mxu0 0
    %172 = vmatpush1.bf16.msra.mxu0 0
    %173 = vmatprep.subr.bf16.mxu0 0
    %174 = vmatpush1.bf16.msra.mxu0 0
    %175 = vmatprep.subr.bf16.mxu0 0
    %176 = vmatpush1.bf16.msra.mxu0 0
    %177 = vmatprep.subr.bf16.mxu0 0
    %178 = vmatpush1.bf16.msra.mxu0 0
    %179 = vmatprep.subr.bf16.mxu0 0
    %180 = vmatpush1.bf16.msra.mxu0 0
    %181 = vmatprep.subr.bf16.mxu0 0
    %182 = vmatpush1.bf16.msra.mxu0 0
    %183 = vmatprep.subr.bf16.mxu0 0
    %184 = vmatpush1.bf16.msra.mxu0 0
    %185 = vmatprep.mubr.bf16.mxu0 0
    %186 = vmatmul.mubr.bf16.gmra.mrb[0].mxu0 %v81
    %v187 = vpop.f32.mrb[0].mxu0
    %v188 = vadd.f32 0.0, %v187
    %v189 = vpop.f32.mrb[0].mxu0
    %v190 = vpop.f32.mrb[0].mxu0
    %v191 = vadd.f32 0.0, %v190
    %v192 = vpop.f32.mrb[0].mxu0
    %193 = vmatprep.mubr.bf16.mxu0 0
    %194 = vmatmul.mubr.bf16.gmra.mrb[0].mxu0 %v82
    %v195 = vpop.f32.mrb[0].mxu0
    %v196 = vadd.f32 0.0, %v195
    %v197 = vpop.f32.mrb[0].mxu0
    %v198 = vpop.f32.mrb[0].mxu0
    %v199 = vadd.f32 0.0, %v198
    %v200 = vpop.f32.mrb[0].mxu0
    %201 = vmatprep.mubr.bf16.mxu0 0
    %202 = vmatmul.mubr.bf16.gmra.mrb[0].mxu0 %v83
    %v203 = vpop.f32.mrb[0].mxu0
    %v204 = vadd.f32 0.0, %v203
    %v205 = vpop.f32.mrb[0].mxu0
    %v206 = vpop.f32.mrb[0].mxu0
    %v207 = vadd.f32 0.0, %v206
    %v208 = vpop.f32.mrb[0].mxu0
    %209 = vmatprep.mubr.bf16.mxu0 0
    %210 = vmatmul.mubr.bf16.gmra.mrb[0].mxu0 %v84
    %v211 = vpop.f32.mrb[0].mxu0
    %v212 = vadd.f32 0.0, %v211
    %v213 = vpop.f32.mrb[0].mxu0
    %v214 = vpop.f32.mrb[0].mxu0
    %v215 = vadd.f32 0.0, %v214
    %v216 = vpop.f32.mrb[0].mxu0
    %217 = vmatprep.mubr.bf16.mxu0 0
    %218 = vmatmul.mubr.bf16.gmra.mrb[0].mxu0 %v85
    %v219 = vpop.f32.mrb[0].mxu0
    %v220 = vadd.f32 0.0, %v219
    %v221 = vpop.f32.mrb[0].mxu0
    %v222 = vpop.f32.mrb[0].mxu0
    %v223 = vadd.f32 0.0, %v222
    %v224 = vpop.f32.mrb[0].mxu0
    %225 = vmatprep.mubr.bf16.mxu0 0
    %226 = vmatmul.mubr.bf16.gmra.mrb[0].mxu0 %v86
    %v227 = vpop.f32.mrb[0].mxu0
    %v228 = vadd.f32 0.0, %v227
    %v229 = vpop.f32.mrb[0].mxu0
    %v230 = vpop.f32.mrb[0].mxu0
    %v231 = vadd.f32 0.0, %v230
    %v232 = vpop.f32.mrb[0].mxu0
    %233 = vmatprep.mubr.bf16.mxu0 0
    %234 = vmatmul.mubr.bf16.gmra.mrb[0].mxu0 %v87
    %v235 = vpop.f32.mrb[0].mxu0
    %v236 = vadd.f32 0.0, %v235
    %v237 = vpop.f32.mrb[0].mxu0
    %v238 = vpop.f32.mrb[0].mxu0
    %v239 = vadd.f32 0.0, %v238
    %v240 = vpop.f32.mrb[0].mxu0
    %241 = vmatprep.mubr.bf16.mxu0 0
    %242 = vmatmul.mubr.bf16.gmra.mrb[0].mxu0 %v88
    %v243 = vpop.f32.mrb[0].mxu0
    %v244 = vadd.f32 0.0, %v243
    %v245 = vpop.f32.mrb[0].mxu0
    %v246 = vpop.f32.mrb[0].mxu0
    %v247 = vadd.f32 0.0, %v246
    %v248 = vpop.f32.mrb[0].mxu0
    %249 = vdwg.mxu0
    %v250 = vld [vmem:[%s4] sm:$0x1]
    %v251 = vld [vmem:[%s5] sm:$0x1]
    %vm252 = vcmask 261120
    %v253 = vsel %vm252, %v188, 0.0
    %v254 = vsel %vm252, %v191, 0.0
    %v255 = vadd.f32 %v253, %v254
    %v256 = vsel %vm252, %v196, 0.0
    %v257 = vadd.f32 %v255, %v256
    %v258 = vsel %vm252, %v199, 0.0
    %v259 = vadd.f32 %v257, %v258
    %v260 = vsel %vm252, %v204, 0.0
    %v261 = vadd.f32 %v259, %v260
    %v262 = vsel %vm252, %v207, 0.0
    %v263 = vadd.f32 %v261, %v262
    %v264 = vsel %vm252, %v212, 0.0
    %v265 = vadd.f32 %v263, %v264
    %v266 = vsel %vm252, %v215, 0.0
    %v267 = vadd.f32 %v265, %v266
    %v268 = vsel %vm252, %v220, 0.0
    %v269 = vadd.f32 %v267, %v268
    %v270 = vsel %vm252, %v223, 0.0
    %v271 = vadd.f32 %v269, %v270
    %v272 = vsel %vm252, %v228, 0.0
    %v273 = vadd.f32 %v271, %v272
    %v274 = vsel %vm252, %v231, 0.0
    %v275 = vadd.f32 %v273, %v274
    %v276 = vsel %vm252, %v236, 0.0
    %v277 = vadd.f32 %v275, %v276
    %v278 = vsel %vm252, %v239, 0.0
    %v279 = vadd.f32 %v277, %v278
    %v280 = vsel %vm252, %v244, 0.0
    %v281 = vadd.f32 %v279, %v280
    %v282 = vsel %vm252, %v247, 0.0
    %v283 = vadd.f32 %v281, %v282
    %v284 = vrot.slane %v283, 4
    %v285 = vadd.f32 %v283, %v284
    %v286 = vrot.slane %v285, 2
    %v287 = vadd.f32 %v285, %v286
    %v288 = vrot.slane %v287, 1
    %v289 = vadd.f32 %v287, %v288
    %v290 = vmul.f32 %v188, %v188
    %v291 = vmul.f32 %v191, %v191
    %v292 = vmul.f32 %v196, %v196
    %v293 = vmul.f32 %v199, %v199
    %v294 = vmul.f32 %v204, %v204
    %v295 = vmul.f32 %v207, %v207
    %v296 = vmul.f32 %v212, %v212
    %v297 = vmul.f32 %v215, %v215
    %v298 = vmul.f32 %v220, %v220
    %v299 = vmul.f32 %v223, %v223
    %v300 = vmul.f32 %v228, %v228
    %v301 = vmul.f32 %v231, %v231
    %v302 = vmul.f32 %v236, %v236
    %v303 = vmul.f32 %v239, %v239
    %v304 = vmul.f32 %v244, %v244
    %v305 = vmul.f32 %v247, %v247
    %v306 = vsel %vm252, %v290, 0.0
    %v307 = vsel %vm252, %v291, 0.0
    %v308 = vadd.f32 %v306, %v307
    %v309 = vsel %vm252, %v292, 0.0
    %v310 = vadd.f32 %v308, %v309
    %v311 = vsel %vm252, %v293, 0.0
    %v312 = vadd.f32 %v310, %v311
    %v313 = vsel %vm252, %v294, 0.0
    %v314 = vadd.f32 %v312, %v313
    %v315 = vsel %vm252, %v295, 0.0
    %v316 = vadd.f32 %v314, %v315
    %v317 = vsel %vm252, %v296, 0.0
    %v318 = vadd.f32 %v316, %v317
    %v319 = vsel %vm252, %v297, 0.0
    %v320 = vadd.f32 %v318, %v319
    %v321 = vsel %vm252, %v298, 0.0
    %v322 = vadd.f32 %v320, %v321
    %v323 = vsel %vm252, %v299, 0.0
    %v324 = vadd.f32 %v322, %v323
    %v325 = vsel %vm252, %v300, 0.0
    %v326 = vadd.f32 %v324, %v325
    %v327 = vsel %vm252, %v301, 0.0
    %v328 = vadd.f32 %v326, %v327
    %v329 = vsel %vm252, %v302, 0.0
    %v330 = vadd.f32 %v328, %v329
    %v331 = vsel %vm252, %v303, 0.0
    %v332 = vadd.f32 %v330, %v331
    %v333 = vsel %vm252, %v304, 0.0
    %v334 = vadd.f32 %v332, %v333
    %v335 = vsel %vm252, %v305, 0.0
    %v336 = vadd.f32 %v334, %v335
    %v337 = vrot.slane %v336, 4
    %v338 = vadd.f32 %v336, %v337
    %v339 = vrot.slane %v338, 2
    %v340 = vadd.f32 %v338, %v339
    %v341 = vrot.slane %v340, 1
    %v342 = vadd.f32 %v340, %v341
    %v343 = vmul.f32 %v289, 0.0078125
    %v344 = vmul.f32 %v342, 0.0078125
    %v345 = vmul.f32 %v343, %v343
    %v346 = vsub.f32 %v344, %v345
    %v347 = vmax.f32 %v346, 0.0
    %v348 = vadd.f32 %v347, 1e-05
    %v349 = vrsqrt.pop %v348
    %v350 = vmul.f32 %v250, %v349
    %v351 = vmul.f32 %v343, %v350
    %v352 = vsub.f32 %v251, %v351
    %v354 = vlaneseq
    %v355 = vshrl.u32 %v354, 7
    %v356 = vsub.s32 0, %v355
    %v357 = vrot.slane %v350, %v356
    %v359 = vmul.f32 %v188, %v357
    %v360 = vmul.f32 %v191, %v357
    %v361 = vmul.f32 %v196, %v357
    %v362 = vmul.f32 %v199, %v357
    %v363 = vmul.f32 %v204, %v357
    %v364 = vmul.f32 %v207, %v357
    %v365 = vmul.f32 %v212, %v357
    %v366 = vmul.f32 %v215, %v357
    %v367 = vmul.f32 %v220, %v357
    %v368 = vmul.f32 %v223, %v357
    %v369 = vmul.f32 %v228, %v357
    %v370 = vmul.f32 %v231, %v357
    %v371 = vmul.f32 %v236, %v357
    %v372 = vmul.f32 %v239, %v357
    %v373 = vmul.f32 %v244, %v357
    %v374 = vmul.f32 %v247, %v357
    %v376 = vlaneseq
    %v377 = vshrl.u32 %v376, 7
    %v378 = vsub.s32 0, %v377
    %v379 = vrot.slane %v352, %v378
    %v381 = vadd.f32 %v359, %v379
    %v382 = vadd.f32 %v360, %v379
    %v383 = vadd.f32 %v361, %v379
    %v384 = vadd.f32 %v362, %v379
    %v385 = vadd.f32 %v363, %v379
    %v386 = vadd.f32 %v364, %v379
    %v387 = vadd.f32 %v365, %v379
    %v388 = vadd.f32 %v366, %v379
    %v389 = vadd.f32 %v367, %v379
    %v390 = vadd.f32 %v368, %v379
    %v391 = vadd.f32 %v369, %v379
    %v392 = vadd.f32 %v370, %v379
    %v393 = vadd.f32 %v371, %v379
    %v394 = vadd.f32 %v372, %v379
    %v395 = vadd.f32 %v373, %v379
    %v396 = vadd.f32 %v374, %v379
    %v397 = vmax.f32 %v381, 0.0
    %v398 = vmax.f32 %v382, 0.0
    %v399 = vmax.f32 %v383, 0.0
    %v400 = vmax.f32 %v384, 0.0
    %v401 = vmax.f32 %v385, 0.0
    %v402 = vmax.f32 %v386, 0.0
    %v403 = vmax.f32 %v387, 0.0
    %v404 = vmax.f32 %v388, 0.0
    %v405 = vmax.f32 %v389, 0.0
    %v406 = vmax.f32 %v390, 0.0
    %v407 = vmax.f32 %v391, 0.0
    %v408 = vmax.f32 %v392, 0.0
    %v409 = vmax.f32 %v393, 0.0
    %v410 = vmax.f32 %v394, 0.0
    %v411 = vmax.f32 %v395, 0.0
    %v412 = vmax.f32 %v396, 0.0
    %413 = vst.msk [vmem:[#allocation2] sm:$0xff] %vm252, 0.0
    %vm414 = vcmask 254976
    %415 = vst.msk [vmem:[#allocation2 + $0x8] sm:$0x3] %vm414, 0.0
    %416 = vst.msk [vmem:[#allocation2 + $0x10] sm:$0xff] %vm252, 0.0
    %417 = vst.msk [vmem:[#allocation2 + $0x18] sm:$0x3] %vm414, 0.0
    %418 = vst.msk [vmem:[#allocation2 + $0x20] sm:$0xff] %vm252, 0.0
    %419 = vst.msk [vmem:[#allocation2 + $0x28] sm:$0x3] %vm414, 0.0
    %420 = vst.msk [vmem:[#allocation2 + $0x30] sm:$0xff] %vm252, 0.0
    %421 = vst.msk [vmem:[#allocation2 + $0x38] sm:$0x3] %vm414, 0.0
    %422 = vst.msk [vmem:[#allocation2 + $0x40] sm:$0xff] %vm252, 0.0
    %423 = vst.msk [vmem:[#allocation2 + $0x48] sm:$0x3] %vm414, 0.0
    %424 = vst.msk [vmem:[#allocation2 + $0x50] sm:$0xff] %vm252, 0.0
    %425 = vst.msk [vmem:[#allocation2 + $0x58] sm:$0x3] %vm414, 0.0
    %426 = vst.msk [vmem:[#allocation2 + $0x60] sm:$0xff] %vm252, 0.0
    %427 = vst.msk [vmem:[#allocation2 + $0x68] sm:$0x3] %vm414, 0.0
    %428 = vst.msk [vmem:[#allocation2 + $0x70] sm:$0xff] %vm252, 0.0
    %429 = vst.msk [vmem:[#allocation2 + $0x78] sm:$0x3] %vm414, 0.0
    %430 = vst.msk [vmem:[#allocation2 + $0x80] sm:$0xff] %vm252, 0.0
    %431 = vst.msk [vmem:[#allocation2 + $0x88] sm:$0x3] %vm414, 0.0
    %432 = vst.msk [vmem:[#allocation2 + $0x90] sm:$0xff] %vm252, 0.0
    %433 = vst.msk [vmem:[#allocation2 + $0x98] sm:$0x3] %vm414, 0.0
    %434 = vst.msk [vmem:[#allocation2 + $0xa0] sm:$0xff] %vm252, 0.0
    %435 = vst.msk [vmem:[#allocation2 + $0xa8] sm:$0x3] %vm414, 0.0
    %436 = vst.msk [vmem:[#allocation2 + $0xb0] sm:$0xff] %vm252, 0.0
    %437 = vst.msk [vmem:[#allocation2 + $0xb8] sm:$0x3] %vm414, 0.0
    %438 = vst.msk [vmem:[#allocation2 + $0xc0] sm:$0xff] %vm252, 0.0
    %439 = vst.msk [vmem:[#allocation2 + $0xc8] sm:$0x3] %vm414, 0.0
    %440 = vst.msk [vmem:[#allocation2 + $0xd0] sm:$0xff] %vm252, 0.0
    %441 = vst.msk [vmem:[#allocation2 + $0xd8] sm:$0x3] %vm414, 0.0
    %442 = vst.msk [vmem:[#allocation2 + $0xe0] sm:$0xff] %vm252, 0.0
    %443 = vst.msk [vmem:[#allocation2 + $0xe8] sm:$0x3] %vm414, 0.0
    %444 = vst.msk [vmem:[#allocation2 + $0xf0] sm:$0xff] %vm252, 0.0
    %445 = vst.msk [vmem:[#allocation2 + $0xf8] sm:$0x3] %vm414, 0.0
    %446 = vst.msk [vmem:[#allocation2 + $0x100] sm:$0xff] %vm252, 0.0
    %447 = vst.msk [vmem:[#allocation2 + $0x108] sm:$0x3] %vm414, 0.0
    %448 = vst.msk [vmem:[#allocation2 + $0x110] sm:$0xff] %vm252, 0.0
    %449 = vst.msk [vmem:[#allocation2 + $0x118] sm:$0x3] %vm414, 0.0
    %450 = vst.msk [vmem:[#allocation2 + $0x120] sm:$0xff] %vm252, 0.0
    %451 = vst.msk [vmem:[#allocation2 + $0x128] sm:$0x3] %vm414, 0.0
    %452 = vst.msk [vmem:[#allocation2 + $0x130] sm:$0xff] %vm252, 0.0
    %453 = vst.msk [vmem:[#allocation2 + $0x138] sm:$0x3] %vm414, 0.0
    %s454 = scalar_lea.vmem [#allocation2], 16
    %455 = vst.msk [vmem:[%s454 + $0x1] sm:$0xff] %vm252, %v397
    %456 = vst.msk [vmem:[%s454 + $0x11] sm:$0xff] %vm252, %v398
    %457 = vst.msk [vmem:[%s454 + $0x21] sm:$0xff] %vm252, %v399
    %458 = vst.msk [vmem:[%s454 + $0x31] sm:$0xff] %vm252, %v400
    %459 = vst.msk [vmem:[%s454 + $0x41] sm:$0xff] %vm252, %v401
    %460 = vst.msk [vmem:[%s454 + $0x51] sm:$0xff] %vm252, %v402
    %461 = vst.msk [vmem:[%s454 + $0x61] sm:$0xff] %vm252, %v403
    %462 = vst.msk [vmem:[%s454 + $0x71] sm:$0xff] %vm252, %v404
    %463 = vst.msk [vmem:[%s454 + $0xa1] sm:$0xff] %vm252, %v405
    %464 = vst.msk [vmem:[%s454 + $0xb1] sm:$0xff] %vm252, %v406
    %465 = vst.msk [vmem:[%s454 + $0xc1] sm:$0xff] %vm252, %v407
    %466 = vst.msk [vmem:[%s454 + $0xd1] sm:$0xff] %vm252, %v408
    %467 = vst.msk [vmem:[%s454 + $0xe1] sm:$0xff] %vm252, %v409
    %468 = vst.msk [vmem:[%s454 + $0xf1] sm:$0xff] %vm252, %v410
    %469 = vst.msk [vmem:[%s454 + $0x101] sm:$0xff] %vm252, %v411
    %470 = vst.msk [vmem:[%s454 + $0x111] sm:$0xff] %vm252, %v412
    %v471 = vld [vmem:[#allocation2] sm:$0xff]
    %v472 = vld [vmem:[#allocation2 + $0x8] sm:$0x3]
    %v473 = vld [vmem:[#allocation2 + $0x10] sm:$0xff]
    %v474 = vld [vmem:[#allocation2 + $0x18] sm:$0x3]
    %v475 = vld [vmem:[#allocation2 + $0x20] sm:$0xff]
    %v476 = vld [vmem:[#allocation2 + $0x28] sm:$0x3]
    %v477 = vld [vmem:[#allocation2 + $0x30] sm:$0xff]
    %v478 = vld [vmem:[#allocation2 + $0x38] sm:$0x3]
    %v479 = vld [vmem:[#allocation2 + $0x40] sm:$0xff]
    %v480 = vld [vmem:[#allocation2 + $0x48] sm:$0x3]
    %v481 = vld [vmem:[#allocation2 + $0x50] sm:$0xff]
    %v482 = vld [vmem:[#allocation2 + $0x58] sm:$0x3]
    %v483 = vld [vmem:[#allocation2 + $0x60] sm:$0xff]
    %v484 = vld [vmem:[#allocation2 + $0x68] sm:$0x3]
    %v485 = vld [vmem:[#allocation2 + $0x70] sm:$0xff]
    %v486 = vld [vmem:[#allocation2 + $0x78] sm:$0x3]
    %v487 = vld [vmem:[#allocation2 + $0xa0] sm:$0xff]
    %v488 = vld [vmem:[#allocation2 + $0xa8] sm:$0x3]
    %v489 = vld [vmem:[#allocation2 + $0xb0] sm:$0xff]
    %v490 = vld [vmem:[#allocation2 + $0xb8] sm:$0x3]
    %v491 = vld [vmem:[#allocation2 + $0xc0] sm:$0xff]
    %v492 = vld [vmem:[#allocation2 + $0xc8] sm:$0x3]
    %v493 = vld [vmem:[#allocation2 + $0xd0] sm:$0xff]
    %v494 = vld [vmem:[#allocation2 + $0xd8] sm:$0x3]
    %v495 = vld [vmem:[#allocation2 + $0xe0] sm:$0xff]
    %v496 = vld [vmem:[#allocation2 + $0xe8] sm:$0x3]
    %v497 = vld [vmem:[#allocation2 + $0xf0] sm:$0xff]
    %v498 = vld [vmem:[#allocation2 + $0xf8] sm:$0x3]
    %v499 = vld [vmem:[#allocation2 + $0x100] sm:$0xff]
    %v500 = vld [vmem:[#allocation2 + $0x108] sm:$0x3]
    %v501 = vld [vmem:[#allocation2 + $0x110] sm:$0xff]
    %v502 = vld [vmem:[#allocation2 + $0x118] sm:$0x3]
    %v503 = vpack.c.bf16 %v473, %v471
    %v504 = vpack.c.bf16 %v477, %v475
    %v505 = vpack.c.bf16 %v481, %v479
    %v506 = vpack.c.bf16 %v485, %v483
    %v507 = vpack.c.bf16 %v489, %v487
    %v508 = vpack.c.bf16 %v493, %v491
    %v509 = vpack.c.bf16 %v497, %v495
    %v510 = vpack.c.bf16 %v501, %v499
    %v511 = vld [vmem:[#allocation6] sm:$0xf]
    %v512 = vld [vmem:[#allocation6 + $0x4] sm:$0xf]
    %v513 = vld [vmem:[#allocation6 + $0x8] sm:$0xf]
    %v514 = vld [vmem:[#allocation6 + $0xc] sm:$0xf]
    %vm547 = vcmask 1046528
    %v548 = vrot.slane %v471, 1
    %v549 = vrot.slane %v472, 1
    %v550 = vsel %vm547, %v548, %v549
    %v551 = vrot.slane %v473, 1
    %v552 = vrot.slane %v474, 1
    %v553 = vsel %vm547, %v551, %v552
    %v554 = vrot.slane %v475, 1
    %v555 = vrot.slane %v476, 1
    %v556 = vsel %vm547, %v554, %v555
    %v557 = vrot.slane %v477, 1
    %v558 = vrot.slane %v478, 1
    %v559 = vsel %vm547, %v557, %v558
    %v560 = vrot.slane %v479, 1
    %v561 = vrot.slane %v480, 1
    %v562 = vsel %vm547, %v560, %v561
    %v563 = vrot.slane %v481, 1
    %v564 = vrot.slane %v482, 1
    %v565 = vsel %vm547, %v563, %v564
    %v566 = vrot.slane %v483, 1
    %v567 = vrot.slane %v484, 1
    %v568 = vsel %vm547, %v566, %v567
    %v569 = vrot.slane %v485, 1
    %v570 = vrot.slane %v486, 1
    %v571 = vsel %vm547, %v569, %v570
    %v572 = vrot.slane %v487, 1
    %v573 = vrot.slane %v488, 1
    %v574 = vsel %vm547, %v572, %v573
    %v575 = vrot.slane %v489, 1
    %v576 = vrot.slane %v490, 1
    %v577 = vsel %vm547, %v575, %v576
    %v578 = vrot.slane %v491, 1
    %v579 = vrot.slane %v492, 1
    %v580 = vsel %vm547, %v578, %v579
    %v581 = vrot.slane %v493, 1
    %v582 = vrot.slane %v494, 1
    %v583 = vsel %vm547, %v581, %v582
    %v584 = vrot.slane %v495, 1
    %v585 = vrot.slane %v496, 1
    %v586 = vsel %vm547, %v584, %v585
    %v587 = vrot.slane %v497, 1
    %v588 = vrot.slane %v498, 1
    %v589 = vsel %vm547, %v587, %v588
    %v590 = vrot.slane %v499, 1
    %v591 = vrot.slane %v500, 1
    %v592 = vsel %vm547, %v590, %v591
    %v593 = vrot.slane %v501, 1
    %v594 = vrot.slane %v502, 1
    %v595 = vsel %vm547, %v593, %v594
    %v612 = vpack.c.bf16 %v553, %v550
    %v613 = vpack.c.bf16 %v559, %v556
    %v614 = vpack.c.bf16 %v565, %v562
    %v615 = vpack.c.bf16 %v571, %v568
    %v616 = vpack.c.bf16 %v577, %v574
    %v617 = vpack.c.bf16 %v583, %v580
    %v618 = vpack.c.bf16 %v589, %v586
    %v619 = vpack.c.bf16 %v595, %v592
    %s620 = scalar_lea.vmem [#allocation6], 16
    %v621 = vld [vmem:[%s620] sm:$0xf]
    %v622 = vld [vmem:[%s620 + $0x4] sm:$0xf]
    %v623 = vld [vmem:[%s620 + $0x8] sm:$0xf]
    %v624 = vld [vmem:[%s620 + $0xc] sm:$0xf]
    %v629 = vunpack.c.l.b16 %v621
    %v630 = vunpack.c.l.b16 %v622
    %v631 = vunpack.c.l.b16 %v623
    %v632 = vunpack.c.l.b16 %v624
    %v633 = vpack.c.b16 %v630, %v629
    %v634 = vpack.c.b16 %v632, %v631
    %v638 = vsel %vm252, %v612, 0
    %v641 = vsel %vm252, %v613, 0
    %v644 = vsel %vm252, %v614, 0
    %v647 = vsel %vm252, %v615, 0
    %v650 = vsel %vm252, %v616, 0
    %v653 = vsel %vm252, %v617, 0
    %v656 = vsel %vm252, %v618, 0
    %v659 = vsel %vm252, %v619, 0
    %661 = vmatprep.subr.bf16.mxu0 0
    %662 = vmatpush1.bf16.msra.mxu0 %v633
    %663 = vmatprep.subr.bf16.mxu0 0
    %664 = vmatpush1.bf16.msra.mxu0 %v634
    %665 = vmatprep.subr.bf16.mxu0 0
    %666 = vmatpush1.bf16.msra.mxu0 0
    %667 = vmatprep.subr.bf16.mxu0 0
    %668 = vmatpush1.bf16.msra.mxu0 0
    %669 = vmatprep.subr.bf16.mxu0 0
    %670 = vmatpush1.bf16.msra.mxu0 0
    %671 = vmatprep.subr.bf16.mxu0 0
    %672 = vmatpush1.bf16.msra.mxu0 0
    %673 = vmatprep.subr.bf16.mxu0 0
    %674 = vmatpush1.bf16.msra.mxu0 0
    %675 = vmatprep.subr.bf16.mxu0 0
    %676 = vmatpush1.bf16.msra.mxu0 0
    %677 = vmatprep.subr.bf16.mxu0 0
    %678 = vmatpush1.bf16.msra.mxu0 0
    %679 = vmatprep.subr.bf16.mxu0 0
    %680 = vmatpush1.bf16.msra.mxu0 0
    %681 = vmatprep.subr.bf16.mxu0 0
    %682 = vmatpush1.bf16.msra.mxu0 0
    %683 = vmatprep.subr.bf16.mxu0 0
    %684 = vmatpush1.bf16.msra.mxu0 0
    %685 = vmatprep.subr.bf16.mxu0 0
    %686 = vmatpush1.bf16.msra.mxu0 0
    %687 = vmatprep.subr.bf16.mxu0 0
    %688 = vmatpush1.bf16.msra.mxu0 0
    %689 = vmatprep.subr.bf16.mxu0 0
    %690 = vmatpush1.bf16.msra.mxu0 0
    %691 = vmatprep.subr.bf16.mxu0 0
    %692 = vmatpush1.bf16.msra.mxu0 0
    %693 = vmatprep.mubr.bf16.mxu0 0
    %694 = vmatmul.mubr.bf16.gmra.mrb[0].mxu0 %v638
    %v695 = vpop.f32.mrb[0].mxu0
    %v696 = vadd.f32 0.0, %v695
    %v697 = vpop.f32.mrb[0].mxu0
    %v698 = vpop.f32.mrb[0].mxu0
    %v699 = vadd.f32 0.0, %v698
    %v700 = vpop.f32.mrb[0].mxu0
    %701 = vmatprep.mubr.bf16.mxu0 0
    %702 = vmatmul.mubr.bf16.gmra.mrb[0].mxu0 %v641
    %v703 = vpop.f32.mrb[0].mxu0
    %v704 = vadd.f32 0.0, %v703
    %v705 = vpop.f32.mrb[0].mxu0
    %v706 = vpop.f32.mrb[0].mxu0
    %v707 = vadd.f32 0.0, %v706
    %v708 = vpop.f32.mrb[0].mxu0
    %709 = vmatprep.mubr.bf16.mxu0 0
    %710 = vmatmul.mubr.bf16.gmra.mrb[0].mxu0 %v644
    %v711 = vpop.f32.mrb[0].mxu0
    %v712 = vadd.f32 0.0, %v711
    %v713 = vpop.f32.mrb[0].mxu0
    %v714 = vpop.f32.mrb[0].mxu0
    %v715 = vadd.f32 0.0, %v714
    %v716 = vpop.f32.mrb[0].mxu0
    %717 = vmatprep.mubr.bf16.mxu0 0
    %718 = vmatmul.mubr.bf16.gmra.mrb[0].mxu0 %v647
    %v719 = vpop.f32.mrb[0].mxu0
    %v720 = vadd.f32 0.0, %v719
    %v721 = vpop.f32.mrb[0].mxu0
    %v722 = vpop.f32.mrb[0].mxu0
    %v723 = vadd.f32 0.0, %v722
    %v724 = vpop.f32.mrb[0].mxu0
    %725 = vmatprep.mubr.bf16.mxu0 0
    %726 = vmatmul.mubr.bf16.gmra.mrb[0].mxu0 %v650
    %v727 = vpop.f32.mrb[0].mxu0
    %v728 = vadd.f32 0.0, %v727
    %v729 = vpop.f32.mrb[0].mxu0
    %v730 = vpop.f32.mrb[0].mxu0
    %v731 = vadd.f32 0.0, %v730
    %v732 = vpop.f32.mrb[0].mxu0
    %733 = vmatprep.mubr.bf16.mxu0 0
    %734 = vmatmul.mubr.bf16.gmra.mrb[0].mxu0 %v653
    %v735 = vpop.f32.mrb[0].mxu0
    %v736 = vadd.f32 0.0, %v735
    %v737 = vpop.f32.mrb[0].mxu0
    %v738 = vpop.f32.mrb[0].mxu0
    %v739 = vadd.f32 0.0, %v738
    %v740 = vpop.f32.mrb[0].mxu0
    %741 = vmatprep.mubr.bf16.mxu0 0
    %742 = vmatmul.mubr.bf16.gmra.mrb[0].mxu0 %v656
    %v743 = vpop.f32.mrb[0].mxu0
    %v744 = vadd.f32 0.0, %v743
    %v745 = vpop.f32.mrb[0].mxu0
    %v746 = vpop.f32.mrb[0].mxu0
    %v747 = vadd.f32 0.0, %v746
    %v748 = vpop.f32.mrb[0].mxu0
    %749 = vmatprep.mubr.bf16.mxu0 0
    %750 = vmatmul.mubr.bf16.gmra.mrb[0].mxu0 %v659
    %v751 = vpop.f32.mrb[0].mxu0
    %v752 = vadd.f32 0.0, %v751
    %v753 = vpop.f32.mrb[0].mxu0
    %v754 = vpop.f32.mrb[0].mxu0
    %v755 = vadd.f32 0.0, %v754
    %v756 = vpop.f32.mrb[0].mxu0
    %757 = vdwg.mxu0
    %v762 = vunpack.c.l.b16 %v511
    %v763 = vunpack.c.l.b16 %v512
    %v764 = vunpack.c.l.b16 %v513
    %v765 = vunpack.c.l.b16 %v514
    %v766 = vpack.c.b16 %v763, %v762
    %v767 = vpack.c.b16 %v765, %v764
    %v771 = vsel %vm252, %v503, 0
    %v774 = vsel %vm252, %v504, 0
    %v777 = vsel %vm252, %v505, 0
    %v780 = vsel %vm252, %v506, 0
    %v783 = vsel %vm252, %v507, 0
    %v786 = vsel %vm252, %v508, 0
    %v789 = vsel %vm252, %v509, 0
    %v792 = vsel %vm252, %v510, 0
    %794 = vmatprep.subr.bf16.mxu0 0
    %795 = vmatpush1.bf16.msra.mxu0 %v766
    %796 = vmatprep.subr.bf16.mxu0 0
    %797 = vmatpush1.bf16.msra.mxu0 %v767
    %798 = vmatprep.subr.bf16.mxu0 0
    %799 = vmatpush1.bf16.msra.mxu0 0
    %800 = vmatprep.subr.bf16.mxu0 0
    %801 = vmatpush1.bf16.msra.mxu0 0
    %802 = vmatprep.subr.bf16.mxu0 0
    %803 = vmatpush1.bf16.msra.mxu0 0
    %804 = vmatprep.subr.bf16.mxu0 0
    %805 = vmatpush1.bf16.msra.mxu0 0
    %806 = vmatprep.subr.bf16.mxu0 0
    %807 = vmatpush1.bf16.msra.mxu0 0
    %808 = vmatprep.subr.bf16.mxu0 0
    %809 = vmatpush1.bf16.msra.mxu0 0
    %810 = vmatprep.subr.bf16.mxu0 0
    %811 = vmatpush1.bf16.msra.mxu0 0
    %812 = vmatprep.subr.bf16.mxu0 0
    %813 = vmatpush1.bf16.msra.mxu0 0
    %814 = vmatprep.subr.bf16.mxu0 0
    %815 = vmatpush1.bf16.msra.mxu0 0
    %816 = vmatprep.subr.bf16.mxu0 0
    %817 = vmatpush1.bf16.msra.mxu0 0
    %818 = vmatprep.subr.bf16.mxu0 0
    %819 = vmatpush1.bf16.msra.mxu0 0
    %820 = vmatprep.subr.bf16.mxu0 0
    %821 = vmatpush1.bf16.msra.mxu0 0
    %822 = vmatprep.subr.bf16.mxu0 0
    %823 = vmatpush1.bf16.msra.mxu0 0
    %824 = vmatprep.subr.bf16.mxu0 0
    %825 = vmatpush1.bf16.msra.mxu0 0
    %826 = vmatprep.mubr.bf16.mxu0 0
    %827 = vmatmul.mubr.bf16.gmra.mrb[0].mxu0 %v771
    %v828 = vpop.f32.mrb[0].mxu0
    %v829 = vadd.f32 %v696, %v828
    %v830 = vpop.f32.mrb[0].mxu0
    %v831 = vpop.f32.mrb[0].mxu0
    %v832 = vadd.f32 %v699, %v831
    %v833 = vpop.f32.mrb[0].mxu0
    %834 = vmatprep.mubr.bf16.mxu0 0
    %835 = vmatmul.mubr.bf16.gmra.mrb[0].mxu0 %v774
    %v836 = vpop.f32.mrb[0].mxu0
    %v837 = vadd.f32 %v704, %v836
    %v838 = vpop.f32.mrb[0].mxu0
    %v839 = vpop.f32.mrb[0].mxu0
    %v840 = vadd.f32 %v707, %v839
    %v841 = vpop.f32.mrb[0].mxu0
    %842 = vmatprep.mubr.bf16.mxu0 0
    %843 = vmatmul.mubr.bf16.gmra.mrb[0].mxu0 %v777
    %v844 = vpop.f32.mrb[0].mxu0
    %v845 = vadd.f32 %v712, %v844
    %v846 = vpop.f32.mrb[0].mxu0
    %v847 = vpop.f32.mrb[0].mxu0
    %v848 = vadd.f32 %v715, %v847
    %v849 = vpop.f32.mrb[0].mxu0
    %850 = vmatprep.mubr.bf16.mxu0 0
    %851 = vmatmul.mubr.bf16.gmra.mrb[0].mxu0 %v780
    %v852 = vpop.f32.mrb[0].mxu0
    %v853 = vadd.f32 %v720, %v852
    %v854 = vpop.f32.mrb[0].mxu0
    %v855 = vpop.f32.mrb[0].mxu0
    %v856 = vadd.f32 %v723, %v855
    %v857 = vpop.f32.mrb[0].mxu0
    %858 = vmatprep.mubr.bf16.mxu0 0
    %859 = vmatmul.mubr.bf16.gmra.mrb[0].mxu0 %v783
    %v860 = vpop.f32.mrb[0].mxu0
    %v861 = vadd.f32 %v728, %v860
    %v862 = vpop.f32.mrb[0].mxu0
    %v863 = vpop.f32.mrb[0].mxu0
    %v864 = vadd.f32 %v731, %v863
    %v865 = vpop.f32.mrb[0].mxu0
    %866 = vmatprep.mubr.bf16.mxu0 0
    %867 = vmatmul.mubr.bf16.gmra.mrb[0].mxu0 %v786
    %v868 = vpop.f32.mrb[0].mxu0
    %v869 = vadd.f32 %v736, %v868
    %v870 = vpop.f32.mrb[0].mxu0
    %v871 = vpop.f32.mrb[0].mxu0
    %v872 = vadd.f32 %v739, %v871
    %v873 = vpop.f32.mrb[0].mxu0
    %874 = vmatprep.mubr.bf16.mxu0 0
    %875 = vmatmul.mubr.bf16.gmra.mrb[0].mxu0 %v789
    %v876 = vpop.f32.mrb[0].mxu0
    %v877 = vadd.f32 %v744, %v876
    %v878 = vpop.f32.mrb[0].mxu0
    %v879 = vpop.f32.mrb[0].mxu0
    %v880 = vadd.f32 %v747, %v879
    %v881 = vpop.f32.mrb[0].mxu0
    %882 = vmatprep.mubr.bf16.mxu0 0
    %883 = vmatmul.mubr.bf16.gmra.mrb[0].mxu0 %v792
    %v884 = vpop.f32.mrb[0].mxu0
    %v885 = vadd.f32 %v752, %v884
    %v886 = vpop.f32.mrb[0].mxu0
    %v887 = vpop.f32.mrb[0].mxu0
    %v888 = vadd.f32 %v755, %v887
    %v889 = vpop.f32.mrb[0].mxu0
    %890 = vdwg.mxu0
    %vm891 = vcmask 1045504
    %v892 = vrot.slane %v471, 2
    %v893 = vrot.slane %v472, 2
    %v894 = vsel %vm891, %v892, %v893
    %v895 = vrot.slane %v473, 2
    %v896 = vrot.slane %v474, 2
    %v897 = vsel %vm891, %v895, %v896
    %v898 = vrot.slane %v475, 2
    %v899 = vrot.slane %v476, 2
    %v900 = vsel %vm891, %v898, %v899
    %v901 = vrot.slane %v477, 2
    %v902 = vrot.slane %v478, 2
    %v903 = vsel %vm891, %v901, %v902
    %v904 = vrot.slane %v479, 2
    %v905 = vrot.slane %v480, 2
    %v906 = vsel %vm891, %v904, %v905
    %v907 = vrot.slane %v481, 2
    %v908 = vrot.slane %v482, 2
    %v909 = vsel %vm891, %v907, %v908
    %v910 = vrot.slane %v483, 2
    %v911 = vrot.slane %v484, 2
    %v912 = vsel %vm891, %v910, %v911
    %v913 = vrot.slane %v485, 2
    %v914 = vrot.slane %v486, 2
    %v915 = vsel %vm891, %v913, %v914
    %v916 = vrot.slane %v487, 2
    %v917 = vrot.slane %v488, 2
    %v918 = vsel %vm891, %v916, %v917
    %v919 = vrot.slane %v489, 2
    %v920 = vrot.slane %v490, 2
    %v921 = vsel %vm891, %v919, %v920
    %v922 = vrot.slane %v491, 2
    %v923 = vrot.slane %v492, 2
    %v924 = vsel %vm891, %v922, %v923
    %v925 = vrot.slane %v493, 2
    %v926 = vrot.slane %v494, 2
    %v927 = vsel %vm891, %v925, %v926
    %v928 = vrot.slane %v495, 2
    %v929 = vrot.slane %v496, 2
    %v930 = vsel %vm891, %v928, %v929
    %v931 = vrot.slane %v497, 2
    %v932 = vrot.slane %v498, 2
    %v933 = vsel %vm891, %v931, %v932
    %v934 = vrot.slane %v499, 2
    %v935 = vrot.slane %v500, 2
    %v936 = vsel %vm891, %v934, %v935
    %v937 = vrot.slane %v501, 2
    %v938 = vrot.slane %v502, 2
    %v939 = vsel %vm891, %v937, %v938
    %v956 = vpack.c.bf16 %v897, %v894
    %v957 = vpack.c.bf16 %v903, %v900
    %v958 = vpack.c.bf16 %v909, %v906
    %v959 = vpack.c.bf16 %v915, %v912
    %v960 = vpack.c.bf16 %v921, %v918
    %v961 = vpack.c.bf16 %v927, %v924
    %v962 = vpack.c.bf16 %v933, %v930
    %v963 = vpack.c.bf16 %v939, %v936
    %s964 = scalar_lea.vmem [#allocation6], 32
    %v965 = vld [vmem:[%s964] sm:$0xf]
    %v966 = vld [vmem:[%s964 + $0x4] sm:$0xf]
    %v967 = vld [vmem:[%s964 + $0x8] sm:$0xf]
    %v968 = vld [vmem:[%s964 + $0xc] sm:$0xf]
    %v973 = vunpack.c.l.b16 %v965
    %v974 = vunpack.c.l.b16 %v966
    %v975 = vunpack.c.l.b16 %v967
    %v976 = vunpack.c.l.b16 %v968
    %v977 = vpack.c.b16 %v974, %v973
    %v978 = vpack.c.b16 %v976, %v975
    %v982 = vsel %vm252, %v956, 0
    %v985 = vsel %vm252, %v957, 0
    %v988 = vsel %vm252, %v958, 0
    %v991 = vsel %vm252, %v959, 0
    %v994 = vsel %vm252, %v960, 0
    %v997 = vsel %vm252, %v961, 0
    %v1000 = vsel %vm252, %v962, 0
    %v1003 = vsel %vm252, %v963, 0
    %1005 = vmatprep.subr.bf16.mxu0 0
    %1006 = vmatpush1.bf16.msra.mxu0 %v977
    %1007 = vmatprep.subr.bf16.mxu0 0
    %1008 = vmatpush1.bf16.msra.mxu0 %v978
    %1009 = vmatprep.subr.bf16.mxu0 0
    %1010 = vmatpush1.bf16.msra.mxu0 0
    %1011 = vmatprep.subr.bf16.mxu0 0
    %1012 = vmatpush1.bf16.msra.mxu0 0
    %1013 = vmatprep.subr.bf16.mxu0 0
    %1014 = vmatpush1.bf16.msra.mxu0 0
    %1015 = vmatprep.subr.bf16.mxu0 0
    %1016 = vmatpush1.bf16.msra.mxu0 0
    %1017 = vmatprep.subr.bf16.mxu0 0
    %1018 = vmatpush1.bf16.msra.mxu0 0
    %1019 = vmatprep.subr.bf16.mxu0 0
    %1020 = vmatpush1.bf16.msra.mxu0 0
    %1021 = vmatprep.subr.bf16.mxu0 0
    %1022 = vmatpush1.bf16.msra.mxu0 0
    %1023 = vmatprep.subr.bf16.mxu0 0
    %1024 = vmatpush1.bf16.msra.mxu0 0
    %1025 = vmatprep.subr.bf16.mxu0 0
    %1026 = vmatpush1.bf16.msra.mxu0 0
    %1027 = vmatprep.subr.bf16.mxu0 0
    %1028 = vmatpush1.bf16.msra.mxu0 0
    %1029 = vmatprep.subr.bf16.mxu0 0
    %1030 = vmatpush1.bf16.msra.mxu0 0
    %1031 = vmatprep.subr.bf16.mxu0 0
    %1032 = vmatpush1.bf16.msra.mxu0 0
    %1033 = vmatprep.subr.bf16.mxu0 0
    %1034 = vmatpush1.bf16.msra.mxu0 0
    %1035 = vmatprep.subr.bf16.mxu0 0
    %1036 = vmatpush1.bf16.msra.mxu0 0
    %1037 = vmatprep.mubr.bf16.mxu0 0
    %1038 = vmatmul.mubr.bf16.gmra.mrb[0].mxu0 %v982
    %v1039 = vpop.f32.mrb[0].mxu0
    %v1040 = vadd.f32 0.0, %v1039
    %v1041 = vpop.f32.mrb[0].mxu0
    %v1042 = vpop.f32.mrb[0].mxu0
    %v1043 = vadd.f32 0.0, %v1042
    %v1044 = vpop.f32.mrb[0].mxu0
    %1045 = vmatprep.mubr.bf16.mxu0 0
    %1046 = vmatmul.mubr.bf16.gmra.mrb[0].mxu0 %v985
    %v1047 = vpop.f32.mrb[0].mxu0
    %v1048 = vadd.f32 0.0, %v1047
    %v1049 = vpop.f32.mrb[0].mxu0
    %v1050 = vpop.f32.mrb[0].mxu0
    %v1051 = vadd.f32 0.0, %v1050
    %v1052 = vpop.f32.mrb[0].mxu0
    %1053 = vmatprep.mubr.bf16.mxu0 0
    %1054 = vmatmul.mubr.bf16.gmra.mrb[0].mxu0 %v988
    %v1055 = vpop.f32.mrb[0].mxu0
    %v1056 = vadd.f32 0.0, %v1055
    %v1057 = vpop.f32.mrb[0].mxu0
    %v1058 = vpop.f32.mrb[0].mxu0
    %v1059 = vadd.f32 0.0, %v1058
    %v1060 = vpop.f32.mrb[0].mxu0
    %1061 = vmatprep.mubr.bf16.mxu0 0
    %1062 = vmatmul.mubr.bf16.gmra.mrb[0].mxu0 %v991
    %v1063 = vpop.f32.mrb[0].mxu0
    %v1064 = vadd.f32 0.0, %v1063
    %v1065 = vpop.f32.mrb[0].mxu0
    %v1066 = vpop.f32.mrb[0].mxu0
    %v1067 = vadd.f32 0.0, %v1066
    %v1068 = vpop.f32.mrb[0].mxu0
    %1069 = vmatprep.mubr.bf16.mxu0 0
    %1070 = vmatmul.mubr.bf16.gmra.mrb[0].mxu0 %v994
    %v1071 = vpop.f32.mrb[0].mxu0
    %v1072 = vadd.f32 0.0, %v1071
    %v1073 = vpop.f32.mrb[0].mxu0
    %v1074 = vpop.f32.mrb[0].mxu0
    %v1075 = vadd.f32 0.0, %v1074
    %v1076 = vpop.f32.mrb[0].mxu0
    %1077 = vmatprep.mubr.bf16.mxu0 0
    %1078 = vmatmul.mubr.bf16.gmra.mrb[0].mxu0 %v997
    %v1079 = vpop.f32.mrb[0].mxu0
    %v1080 = vadd.f32 0.0, %v1079
    %v1081 = vpop.f32.mrb[0].mxu0
    %v1082 = vpop.f32.mrb[0].mxu0
    %v1083 = vadd.f32 0.0, %v1082
    %v1084 = vpop.f32.mrb[0].mxu0
    %1085 = vmatprep.mubr.bf16.mxu0 0
    %1086 = vmatmul.mubr.bf16.gmra.mrb[0].mxu0 %v1000
    %v1087 = vpop.f32.mrb[0].mxu0
    %v1088 = vadd.f32 0.0, %v1087
    %v1089 = vpop.f32.mrb[0].mxu0
    %v1090 = vpop.f32.mrb[0].mxu0
    %v1091 = vadd.f32 0.0, %v1090
    %v1092 = vpop.f32.mrb[0].mxu0
    %1093 = vmatprep.mubr.bf16.mxu0 0
    %1094 = vmatmul.mubr.bf16.gmra.mrb[0].mxu0 %v1003
    %v1095 = vpop.f32.mrb[0].mxu0
    %v1096 = vadd.f32 0.0, %v1095
    %v1097 = vpop.f32.mrb[0].mxu0
    %v1098 = vpop.f32.mrb[0].mxu0
    %v1099 = vadd.f32 0.0, %v1098
    %v1100 = vpop.f32.mrb[0].mxu0
    %1101 = vdwg.mxu0
    %v1102 = vadd.f32 %v829, %v1040
    %v1103 = vadd.f32 %v832, %v1043
    %v1104 = vadd.f32 %v837, %v1048
    %v1105 = vadd.f32 %v840, %v1051
    %v1106 = vadd.f32 %v845, %v1056
    %v1107 = vadd.f32 %v848, %v1059
    %v1108 = vadd.f32 %v853, %v1064
    %v1109 = vadd.f32 %v856, %v1067
    %v1110 = vadd.f32 %v861, %v1072
    %v1111 = vadd.f32 %v864, %v1075
    %v1112 = vadd.f32 %v869, %v1080
    %v1113 = vadd.f32 %v872, %v1083
    %v1114 = vadd.f32 %v877, %v1088
    %v1115 = vadd.f32 %v880, %v1091
    %v1116 = vadd.f32 %v885, %v1096
    %v1117 = vadd.f32 %v888, %v1099
    %v1118 = vld [vmem:[%s454] sm:$0xff]
    %v1119 = vld [vmem:[%s454 + $0x8] sm:$0x3]
    %v1120 = vld [vmem:[%s454 + $0x10] sm:$0xff]
    %v1121 = vld [vmem:[%s454 + $0x18] sm:$0x3]
    %v1122 = vld [vmem:[%s454 + $0x20] sm:$0xff]
    %v1123 = vld [vmem:[%s454 + $0x28] sm:$0x3]
    %v1124 = vld [vmem:[%s454 + $0x30] sm:$0xff]
    %v1125 = vld [vmem:[%s454 + $0x38] sm:$0x3]
    %v1126 = vld [vmem:[%s454 + $0x40] sm:$0xff]
    %v1127 = vld [vmem:[%s454 + $0x48] sm:$0x3]
    %v1128 = vld [vmem:[%s454 + $0x50] sm:$0xff]
    %v1129 = vld [vmem:[%s454 + $0x58] sm:$0x3]
    %v1130 = vld [vmem:[%s454 + $0x60] sm:$0xff]
    %v1131 = vld [vmem:[%s454 + $0x68] sm:$0x3]
    %v1132 = vld [vmem:[%s454 + $0x70] sm:$0xff]
    %v1133 = vld [vmem:[%s454 + $0x78] sm:$0x3]
    %v1134 = vld [vmem:[%s454 + $0xa0] sm:$0xff]
    %v1135 = vld [vmem:[%s454 + $0xa8] sm:$0x3]
    %v1136 = vld [vmem:[%s454 + $0xb0] sm:$0xff]
    %v1137 = vld [vmem:[%s454 + $0xb8] sm:$0x3]
    %v1138 = vld [vmem:[%s454 + $0xc0] sm:$0xff]
    %v1139 = vld [vmem:[%s454 + $0xc8] sm:$0x3]
    %v1140 = vld [vmem:[%s454 + $0xd0] sm:$0xff]
    %v1141 = vld [vmem:[%s454 + $0xd8] sm:$0x3]
    %v1142 = vld [vmem:[%s454 + $0xe0] sm:$0xff]
    %v1143 = vld [vmem:[%s454 + $0xe8] sm:$0x3]
    %v1144 = vld [vmem:[%s454 + $0xf0] sm:$0xff]
    %v1145 = vld [vmem:[%s454 + $0xf8] sm:$0x3]
    %v1146 = vld [vmem:[%s454 + $0x100] sm:$0xff]
    %v1147 = vld [vmem:[%s454 + $0x108] sm:$0x3]
    %v1148 = vld [vmem:[%s454 + $0x110] sm:$0xff]
    %v1149 = vld [vmem:[%s454 + $0x118] sm:$0x3]
    %v1150 = vpack.c.bf16 %v1120, %v1118
    %v1151 = vpack.c.bf16 %v1124, %v1122
    %v1152 = vpack.c.bf16 %v1128, %v1126
    %v1153 = vpack.c.bf16 %v1132, %v1130
    %v1154 = vpack.c.bf16 %v1136, %v1134
    %v1155 = vpack.c.bf16 %v1140, %v1138
    %v1156 = vpack.c.bf16 %v1144, %v1142
    %v1157 = vpack.c.bf16 %v1148, %v1146
    %s1158 = scalar_lea.vmem [#allocation6], 48
    %v1159 = vld [vmem:[%s1158] sm:$0xf]
    %v1160 = vld [vmem:[%s1158 + $0x4] sm:$0xf]
    %v1161 = vld [vmem:[%s1158 + $0x8] sm:$0xf]
    %v1162 = vld [vmem:[%s1158 + $0xc] sm:$0xf]
    %v1195 = vrot.slane %v1118, 1
    %v1196 = vrot.slane %v1119, 1
    %v1197 = vsel %vm547, %v1195, %v1196
    %v1198 = vrot.slane %v1120, 1
    %v1199 = vrot.slane %v1121, 1
    %v1200 = vsel %vm547, %v1198, %v1199
    %v1201 = vrot.slane %v1122, 1
    %v1202 = vrot.slane %v1123, 1
    %v1203 = vsel %vm547, %v1201, %v1202
    %v1204 = vrot.slane %v1124, 1
    %v1205 = vrot.slane %v1125, 1
    %v1206 = vsel %vm547, %v1204, %v1205
    %v1207 = vrot.slane %v1126, 1
    %v1208 = vrot.slane %v1127, 1
    %v1209 = vsel %vm547, %v1207, %v1208
    %v1210 = vrot.slane %v1128, 1
    %v1211 = vrot.slane %v1129, 1
    %v1212 = vsel %vm547, %v1210, %v1211
    %v1213 = vrot.slane %v1130, 1
    %v1214 = vrot.slane %v1131, 1
    %v1215 = vsel %vm547, %v1213, %v1214
    %v1216 = vrot.slane %v1132, 1
    %v1217 = vrot.slane %v1133, 1
    %v1218 = vsel %vm547, %v1216, %v1217
    %v1219 = vrot.slane %v1134, 1
    %v1220 = vrot.slane %v1135, 1
    %v1221 = vsel %vm547, %v1219, %v1220
    %v1222 = vrot.slane %v1136, 1
    %v1223 = vrot.slane %v1137, 1
    %v1224 = vsel %vm547, %v1222, %v1223
    %v1225 = vrot.slane %v1138, 1
    %v1226 = vrot.slane %v1139, 1
    %v1227 = vsel %vm547, %v1225, %v1226
    %v1228 = vrot.slane %v1140, 1
    %v1229 = vrot.slane %v1141, 1
    %v1230 = vsel %vm547, %v1228, %v1229
    %v1231 = vrot.slane %v1142, 1
    %v1232 = vrot.slane %v1143, 1
    %v1233 = vsel %vm547, %v1231, %v1232
    %v1234 = vrot.slane %v1144, 1
    %v1235 = vrot.slane %v1145, 1
    %v1236 = vsel %vm547, %v1234, %v1235
    %v1237 = vrot.slane %v1146, 1
    %v1238 = vrot.slane %v1147, 1
    %v1239 = vsel %vm547, %v1237, %v1238
    %v1240 = vrot.slane %v1148, 1
    %v1241 = vrot.slane %v1149, 1
    %v1242 = vsel %vm547, %v1240, %v1241
    %v1259 = vpack.c.bf16 %v1200, %v1197
    %v1260 = vpack.c.bf16 %v1206, %v1203
    %v1261 = vpack.c.bf16 %v1212, %v1209
    %v1262 = vpack.c.bf16 %v1218, %v1215
    %v1263 = vpack.c.bf16 %v1224, %v1221
    %v1264 = vpack.c.bf16 %v1230, %v1227
    %v1265 = vpack.c.bf16 %v1236, %v1233
    %v1266 = vpack.c.bf16 %v1242, %v1239
    %s1267 = scalar_lea.vmem [#allocation6], 64
    %v1268 = vld [vmem:[%s1267] sm:$0xf]
    %v1269 = vld [vmem:[%s1267 + $0x4] sm:$0xf]
    %v1270 = vld [vmem:[%s1267 + $0x8] sm:$0xf]
    %v1271 = vld [vmem:[%s1267 + $0xc] sm:$0xf]
    %v1276 = vunpack.c.l.b16 %v1268
    %v1277 = vunpack.c.l.b16 %v1269
    %v1278 = vunpack.c.l.b16 %v1270
    %v1279 = vunpack.c.l.b16 %v1271
    %v1280 = vpack.c.b16 %v1277, %v1276
    %v1281 = vpack.c.b16 %v1279, %v1278
    %v1285 = vsel %vm252, %v1259, 0
    %v1288 = vsel %vm252, %v1260, 0
    %v1291 = vsel %vm252, %v1261, 0
    %v1294 = vsel %vm252, %v1262, 0
    %v1297 = vsel %vm252, %v1263, 0
    %v1300 = vsel %vm252, %v1264, 0
    %v1303 = vsel %vm252, %v1265, 0
    %v1306 = vsel %vm252, %v1266, 0
    %1308 = vmatprep.subr.bf16.mxu0 0
    %1309 = vmatpush1.bf16.msra.mxu0 %v1280
    %1310 = vmatprep.subr.bf16.mxu0 0
    %1311 = vmatpush1.bf16.msra.mxu0 %v1281
    %1312 = vmatprep.subr.bf16.mxu0 0
    %1313 = vmatpush1.bf16.msra.mxu0 0
    %1314 = vmatprep.subr.bf16.mxu0 0
    %1315 = vmatpush1.bf16.msra.mxu0 0
    %1316 = vmatprep.subr.bf16.mxu0 0
    %1317 = vmatpush1.bf16.msra.mxu0 0
    %1318 = vmatprep.subr.bf16.mxu0 0
    %1319 = vmatpush1.bf16.msra.mxu0 0
    %1320 = vmatprep.subr.bf16.mxu0 0
    %1321 = vmatpush1.bf16.msra.mxu0 0
    %1322 = vmatprep.subr.bf16.mxu0 0
    %1323 = vmatpush1.bf16.msra.mxu0 0
    %1324 = vmatprep.subr.bf16.mxu0 0
    %1325 = vmatpush1.bf16.msra.mxu0 0
    %1326 = vmatprep.subr.bf16.mxu0 0
    %1327 = vmatpush1.bf16.msra.mxu0 0
    %1328 = vmatprep.subr.bf16.mxu0 0
    %1329 = vmatpush1.bf16.msra.mxu0 0
    %1330 = vmatprep.subr.bf16.mxu0 0
    %1331 = vmatpush1.bf16.msra.mxu0 0
    %1332 = vmatprep.subr.bf16.mxu0 0
    %1333 = vmatpush1.bf16.msra.mxu0 0
    %1334 = vmatprep.subr.bf16.mxu0 0
    %1335 = vmatpush1.bf16.msra.mxu0 0
    %1336 = vmatprep.subr.bf16.mxu0 0
    %1337 = vmatpush1.bf16.msra.mxu0 0
    %1338 = vmatprep.subr.bf16.mxu0 0
    %1339 = vmatpush1.bf16.msra.mxu0 0
    %1340 = vmatprep.mubr.bf16.mxu0 0
    %1341 = vmatmul.mubr.bf16.gmra.mrb[0].mxu0 %v1285
    %v1342 = vpop.f32.mrb[0].mxu0
    %v1343 = vadd.f32 0.0, %v1342
    %v1344 = vpop.f32.mrb[0].mxu0
    %v1345 = vpop.f32.mrb[0].mxu0
    %v1346 = vadd.f32 0.0, %v1345
    %v1347 = vpop.f32.mrb[0].mxu0
    %1348 = vmatprep.mubr.bf16.mxu0 0
    %1349 = vmatmul.mubr.bf16.gmra.mrb[0].mxu0 %v1288
    %v1350 = vpop.f32.mrb[0].mxu0
    %v1351 = vadd.f32 0.0, %v1350
    %v1352 = vpop.f32.mrb[0].mxu0
    %v1353 = vpop.f32.mrb[0].mxu0
    %v1354 = vadd.f32 0.0, %v1353
    %v1355 = vpop.f32.mrb[0].mxu0
    %1356 = vmatprep.mubr.bf16.mxu0 0
    %1357 = vmatmul.mubr.bf16.gmra.mrb[0].mxu0 %v1291
    %v1358 = vpop.f32.mrb[0].mxu0
    %v1359 = vadd.f32 0.0, %v1358
    %v1360 = vpop.f32.mrb[0].mxu0
    %v1361 = vpop.f32.mrb[0].mxu0
    %v1362 = vadd.f32 0.0, %v1361
    %v1363 = vpop.f32.mrb[0].mxu0
    %1364 = vmatprep.mubr.bf16.mxu0 0
    %1365 = vmatmul.mubr.bf16.gmra.mrb[0].mxu0 %v1294
    %v1366 = vpop.f32.mrb[0].mxu0
    %v1367 = vadd.f32 0.0, %v1366
    %v1368 = vpop.f32.mrb[0].mxu0
    %v1369 = vpop.f32.mrb[0].mxu0
    %v1370 = vadd.f32 0.0, %v1369
    %v1371 = vpop.f32.mrb[0].mxu0
    %1372 = vmatprep.mubr.bf16.mxu0 0
    %1373 = vmatmul.mubr.bf16.gmra.mrb[0].mxu0 %v1297
    %v1374 = vpop.f32.mrb[0].mxu0
    %v1375 = vadd.f32 0.0, %v1374
    %v1376 = vpop.f32.mrb[0].mxu0
    %v1377 = vpop.f32.mrb[0].mxu0
    %v1378 = vadd.f32 0.0, %v1377
    %v1379 = vpop.f32.mrb[0].mxu0
    %1380 = vmatprep.mubr.bf16.mxu0 0
    %1381 = vmatmul.mubr.bf16.gmra.mrb[0].mxu0 %v1300
    %v1382 = vpop.f32.mrb[0].mxu0
    %v1383 = vadd.f32 0.0, %v1382
    %v1384 = vpop.f32.mrb[0].mxu0
    %v1385 = vpop.f32.mrb[0].mxu0
    %v1386 = vadd.f32 0.0, %v1385
    %v1387 = vpop.f32.mrb[0].mxu0
    %1388 = vmatprep.mubr.bf16.mxu0 0
    %1389 = vmatmul.mubr.bf16.gmra.mrb[0].mxu0 %v1303
    %v1390 = vpop.f32.mrb[0].mxu0
    %v1391 = vadd.f32 0.0, %v1390
    %v1392 = vpop.f32.mrb[0].mxu0
    %v1393 = vpop.f32.mrb[0].mxu0
    %v1394 = vadd.f32 0.0, %v1393
    %v1395 = vpop.f32.mrb[0].mxu0
    %1396 = vmatprep.mubr.bf16.mxu0 0
    %1397 = vmatmul.mubr.bf16.gmra.mrb[0].mxu0 %v1306
    %v1398 = vpop.f32.mrb[0].mxu0
    %v1399 = vadd.f32 0.0, %v1398
    %v1400 = vpop.f32.mrb[0].mxu0
    %v1401 = vpop.f32.mrb[0].mxu0
    %v1402 = vadd.f32 0.0, %v1401
    %v1403 = vpop.f32.mrb[0].mxu0
    %1404 = vdwg.mxu0
    %v1409 = vunpack.c.l.b16 %v1159
    %v1410 = vunpack.c.l.b16 %v1160
    %v1411 = vunpack.c.l.b16 %v1161
    %v1412 = vunpack.c.l.b16 %v1162
    %v1413 = vpack.c.b16 %v1410, %v1409
    %v1414 = vpack.c.b16 %v1412, %v1411
    %v1418 = vsel %vm252, %v1150, 0
    %v1421 = vsel %vm252, %v1151, 0
    %v1424 = vsel %vm252, %v1152, 0
    %v1427 = vsel %vm252, %v1153, 0
    %v1430 = vsel %vm252, %v1154, 0
    %v1433 = vsel %vm252, %v1155, 0
    %v1436 = vsel %vm252, %v1156, 0
    %v1439 = vsel %vm252, %v1157, 0
    %1441 = vmatprep.subr.bf16.mxu0 0
    %1442 = vmatpush1.bf16.msra.mxu0 %v1413
    %1443 = vmatprep.subr.bf16.mxu0 0
    %1444 = vmatpush1.bf16.msra.mxu0 %v1414
    %1445 = vmatprep.subr.bf16.mxu0 0
    %1446 = vmatpush1.bf16.msra.mxu0 0
    %1447 = vmatprep.subr.bf16.mxu0 0
    %1448 = vmatpush1.bf16.msra.mxu0 0
    %1449 = vmatprep.subr.bf16.mxu0 0
    %1450 = vmatpush1.bf16.msra.mxu0 0
    %1451 = vmatprep.subr.bf16.mxu0 0
    %1452 = vmatpush1.bf16.msra.mxu0 0
    %1453 = vmatprep.subr.bf16.mxu0 0
    %1454 = vmatpush1.bf16.msra.mxu0 0
    %1455 = vmatprep.subr.bf16.mxu0 0
    %1456 = vmatpush1.bf16.msra.mxu0 0
    %1457 = vmatprep.subr.bf16.mxu0 0
    %1458 = vmatpush1.bf16.msra.mxu0 0
    %1459 = vmatprep.subr.bf16.mxu0 0
    %1460 = vmatpush1.bf16.msra.mxu0 0
    %1461 = vmatprep.subr.bf16.mxu0 0
    %1462 = vmatpush1.bf16.msra.mxu0 0
    %1463 = vmatprep.subr.bf16.mxu0 0
    %1464 = vmatpush1.bf16.msra.mxu0 0
    %1465 = vmatprep.subr.bf16.mxu0 0
    %1466 = vmatpush1.bf16.msra.mxu0 0
    %1467 = vmatprep.subr.bf16.mxu0 0
    %1468 = vmatpush1.bf16.msra.mxu0 0
    %1469 = vmatprep.subr.bf16.mxu0 0
    %1470 = vmatpush1.bf16.msra.mxu0 0
    %1471 = vmatprep.subr.bf16.mxu0 0
    %1472 = vmatpush1.bf16.msra.mxu0 0
    %1473 = vmatprep.mubr.bf16.mxu0 0
    %1474 = vmatmul.mubr.bf16.gmra.mrb[0].mxu0 %v1418
    %v1475 = vpop.f32.mrb[0].mxu0
    %v1476 = vadd.f32 %v1343, %v1475
    %v1477 = vpop.f32.mrb[0].mxu0
    %v1478 = vpop.f32.mrb[0].mxu0
    %v1479 = vadd.f32 %v1346, %v1478
    %v1480 = vpop.f32.mrb[0].mxu0
    %1481 = vmatprep.mubr.bf16.mxu0 0
    %1482 = vmatmul.mubr.bf16.gmra.mrb[0].mxu0 %v1421
    %v1483 = vpop.f32.mrb[0].mxu0
    %v1484 = vadd.f32 %v1351, %v1483
    %v1485 = vpop.f32.mrb[0].mxu0
    %v1486 = vpop.f32.mrb[0].mxu0
    %v1487 = vadd.f32 %v1354, %v1486
    %v1488 = vpop.f32.mrb[0].mxu0
    %1489 = vmatprep.mubr.bf16.mxu0 0
    %1490 = vmatmul.mubr.bf16.gmra.mrb[0].mxu0 %v1424
    %v1491 = vpop.f32.mrb[0].mxu0
    %v1492 = vadd.f32 %v1359, %v1491
    %v1493 = vpop.f32.mrb[0].mxu0
    %v1494 = vpop.f32.mrb[0].mxu0
    %v1495 = vadd.f32 %v1362, %v1494
    %v1496 = vpop.f32.mrb[0].mxu0
    %1497 = vmatprep.mubr.bf16.mxu0 0
    %1498 = vmatmul.mubr.bf16.gmra.mrb[0].mxu0 %v1427
    %v1499 = vpop.f32.mrb[0].mxu0
    %v1500 = vadd.f32 %v1367, %v1499
    %v1501 = vpop.f32.mrb[0].mxu0
    %v1502 = vpop.f32.mrb[0].mxu0
    %v1503 = vadd.f32 %v1370, %v1502
    %v1504 = vpop.f32.mrb[0].mxu0
    %1505 = vmatprep.mubr.bf16.mxu0 0
    %1506 = vmatmul.mubr.bf16.gmra.mrb[0].mxu0 %v1430
    %v1507 = vpop.f32.mrb[0].mxu0
    %v1508 = vadd.f32 %v1375, %v1507
    %v1509 = vpop.f32.mrb[0].mxu0
    %v1510 = vpop.f32.mrb[0].mxu0
    %v1511 = vadd.f32 %v1378, %v1510
    %v1512 = vpop.f32.mrb[0].mxu0
    %1513 = vmatprep.mubr.bf16.mxu0 0
    %1514 = vmatmul.mubr.bf16.gmra.mrb[0].mxu0 %v1433
    %v1515 = vpop.f32.mrb[0].mxu0
    %v1516 = vadd.f32 %v1383, %v1515
    %v1517 = vpop.f32.mrb[0].mxu0
    %v1518 = vpop.f32.mrb[0].mxu0
    %v1519 = vadd.f32 %v1386, %v1518
    %v1520 = vpop.f32.mrb[0].mxu0
    %1521 = vmatprep.mubr.bf16.mxu0 0
    %1522 = vmatmul.mubr.bf16.gmra.mrb[0].mxu0 %v1436
    %v1523 = vpop.f32.mrb[0].mxu0
    %v1524 = vadd.f32 %v1391, %v1523
    %v1525 = vpop.f32.mrb[0].mxu0
    %v1526 = vpop.f32.mrb[0].mxu0
    %v1527 = vadd.f32 %v1394, %v1526
    %v1528 = vpop.f32.mrb[0].mxu0
    %1529 = vmatprep.mubr.bf16.mxu0 0
    %1530 = vmatmul.mubr.bf16.gmra.mrb[0].mxu0 %v1439
    %v1531 = vpop.f32.mrb[0].mxu0
    %v1532 = vadd.f32 %v1399, %v1531
    %v1533 = vpop.f32.mrb[0].mxu0
    %v1534 = vpop.f32.mrb[0].mxu0
    %v1535 = vadd.f32 %v1402, %v1534
    %v1536 = vpop.f32.mrb[0].mxu0
    %1537 = vdwg.mxu0
    %v1538 = vrot.slane %v1118, 2
    %v1539 = vrot.slane %v1119, 2
    %v1540 = vsel %vm891, %v1538, %v1539
    %v1541 = vrot.slane %v1120, 2
    %v1542 = vrot.slane %v1121, 2
    %v1543 = vsel %vm891, %v1541, %v1542
    %v1544 = vrot.slane %v1122, 2
    %v1545 = vrot.slane %v1123, 2
    %v1546 = vsel %vm891, %v1544, %v1545
    %v1547 = vrot.slane %v1124, 2
    %v1548 = vrot.slane %v1125, 2
    %v1549 = vsel %vm891, %v1547, %v1548
    %v1550 = vrot.slane %v1126, 2
    %v1551 = vrot.slane %v1127, 2
    %v1552 = vsel %vm891, %v1550, %v1551
    %v1553 = vrot.slane %v1128, 2
    %v1554 = vrot.slane %v1129, 2
    %v1555 = vsel %vm891, %v1553, %v1554
    %v1556 = vrot.slane %v1130, 2
    %v1557 = vrot.slane %v1131, 2
    %v1558 = vsel %vm891, %v1556, %v1557
    %v1559 = vrot.slane %v1132, 2
    %v1560 = vrot.slane %v1133, 2
    %v1561 = vsel %vm891, %v1559, %v1560
    %v1562 = vrot.slane %v1134, 2
    %v1563 = vrot.slane %v1135, 2
    %v1564 = vsel %vm891, %v1562, %v1563
    %v1565 = vrot.slane %v1136, 2
    %v1566 = vrot.slane %v1137, 2
    %v1567 = vsel %vm891, %v1565, %v1566
    %v1568 = vrot.slane %v1138, 2
    %v1569 = vrot.slane %v1139, 2
    %v1570 = vsel %vm891, %v1568, %v1569
    %v1571 = vrot.slane %v1140, 2
    %v1572 = vrot.slane %v1141, 2
    %v1573 = vsel %vm891, %v1571, %v1572
    %v1574 = vrot.slane %v1142, 2
    %v1575 = vrot.slane %v1143, 2
    %v1576 = vsel %vm891, %v1574, %v1575
    %v1577 = vrot.slane %v1144, 2
    %v1578 = vrot.slane %v1145, 2
    %v1579 = vsel %vm891, %v1577, %v1578
    %v1580 = vrot.slane %v1146, 2
    %v1581 = vrot.slane %v1147, 2
    %v1582 = vsel %vm891, %v1580, %v1581
    %v1583 = vrot.slane %v1148, 2
    %v1584 = vrot.slane %v1149, 2
    %v1585 = vsel %vm891, %v1583, %v1584
    %v1602 = vpack.c.bf16 %v1543, %v1540
    %v1603 = vpack.c.bf16 %v1549, %v1546
    %v1604 = vpack.c.bf16 %v1555, %v1552
    %v1605 = vpack.c.bf16 %v1561, %v1558
    %v1606 = vpack.c.bf16 %v1567, %v1564
    %v1607 = vpack.c.bf16 %v1573, %v1570
    %v1608 = vpack.c.bf16 %v1579, %v1576
    %v1609 = vpack.c.bf16 %v1585, %v1582
    %s1610 = scalar_lea.vmem [#allocation6], 80
    %v1611 = vld [vmem:[%s1610] sm:$0xf]
    %v1612 = vld [vmem:[%s1610 + $0x4] sm:$0xf]
    %v1613 = vld [vmem:[%s1610 + $0x8] sm:$0xf]
    %v1614 = vld [vmem:[%s1610 + $0xc] sm:$0xf]
    %v1619 = vunpack.c.l.b16 %v1611
    %v1620 = vunpack.c.l.b16 %v1612
    %v1621 = vunpack.c.l.b16 %v1613
    %v1622 = vunpack.c.l.b16 %v1614
    %v1623 = vpack.c.b16 %v1620, %v1619
    %v1624 = vpack.c.b16 %v1622, %v1621
    %v1628 = vsel %vm252, %v1602, 0
    %v1631 = vsel %vm252, %v1603, 0
    %v1634 = vsel %vm252, %v1604, 0
    %v1637 = vsel %vm252, %v1605, 0
    %v1640 = vsel %vm252, %v1606, 0
    %v1643 = vsel %vm252, %v1607, 0
    %v1646 = vsel %vm252, %v1608, 0
    %v1649 = vsel %vm252, %v1609, 0
    %1651 = vmatprep.subr.bf16.mxu0 0
    %1652 = vmatpush1.bf16.msra.mxu0 %v1623
    %1653 = vmatprep.subr.bf16.mxu0 0
    %1654 = vmatpush1.bf16.msra.mxu0 %v1624
    %1655 = vmatprep.subr.bf16.mxu0 0
    %1656 = vmatpush1.bf16.msra.mxu0 0
    %1657 = vmatprep.subr.bf16.mxu0 0
    %1658 = vmatpush1.bf16.msra.mxu0 0
    %1659 = vmatprep.subr.bf16.mxu0 0
    %1660 = vmatpush1.bf16.msra.mxu0 0
    %1661 = vmatprep.subr.bf16.mxu0 0
    %1662 = vmatpush1.bf16.msra.mxu0 0
    %1663 = vmatprep.subr.bf16.mxu0 0
    %1664 = vmatpush1.bf16.msra.mxu0 0
    %1665 = vmatprep.subr.bf16.mxu0 0
    %1666 = vmatpush1.bf16.msra.mxu0 0
    %1667 = vmatprep.subr.bf16.mxu0 0
    %1668 = vmatpush1.bf16.msra.mxu0 0
    %1669 = vmatprep.subr.bf16.mxu0 0
    %1670 = vmatpush1.bf16.msra.mxu0 0
    %1671 = vmatprep.subr.bf16.mxu0 0
    %1672 = vmatpush1.bf16.msra.mxu0 0
    %1673 = vmatprep.subr.bf16.mxu0 0
    %1674 = vmatpush1.bf16.msra.mxu0 0
    %1675 = vmatprep.subr.bf16.mxu0 0
    %1676 = vmatpush1.bf16.msra.mxu0 0
    %1677 = vmatprep.subr.bf16.mxu0 0
    %1678 = vmatpush1.bf16.msra.mxu0 0
    %1679 = vmatprep.subr.bf16.mxu0 0
    %1680 = vmatpush1.bf16.msra.mxu0 0
    %1681 = vmatprep.subr.bf16.mxu0 0
    %1682 = vmatpush1.bf16.msra.mxu0 0
    %1683 = vmatprep.mubr.bf16.mxu0 0
    %1684 = vmatmul.mubr.bf16.gmra.mrb[0].mxu0 %v1628
    %v1685 = vpop.f32.mrb[0].mxu0
    %v1686 = vadd.f32 0.0, %v1685
    %v1687 = vpop.f32.mrb[0].mxu0
    %v1688 = vpop.f32.mrb[0].mxu0
    %v1689 = vadd.f32 0.0, %v1688
    %v1690 = vpop.f32.mrb[0].mxu0
    %1691 = vmatprep.mubr.bf16.mxu0 0
    %1692 = vmatmul.mubr.bf16.gmra.mrb[0].mxu0 %v1631
    %v1693 = vpop.f32.mrb[0].mxu0
    %v1694 = vadd.f32 0.0, %v1693
    %v1695 = vpop.f32.mrb[0].mxu0
    %v1696 = vpop.f32.mrb[0].mxu0
    %v1697 = vadd.f32 0.0, %v1696
    %v1698 = vpop.f32.mrb[0].mxu0
    %1699 = vmatprep.mubr.bf16.mxu0 0
    %1700 = vmatmul.mubr.bf16.gmra.mrb[0].mxu0 %v1634
    %v1701 = vpop.f32.mrb[0].mxu0
    %v1702 = vadd.f32 0.0, %v1701
    %v1703 = vpop.f32.mrb[0].mxu0
    %v1704 = vpop.f32.mrb[0].mxu0
    %v1705 = vadd.f32 0.0, %v1704
    %v1706 = vpop.f32.mrb[0].mxu0
    %1707 = vmatprep.mubr.bf16.mxu0 0
    %1708 = vmatmul.mubr.bf16.gmra.mrb[0].mxu0 %v1637
    %v1709 = vpop.f32.mrb[0].mxu0
    %v1710 = vadd.f32 0.0, %v1709
    %v1711 = vpop.f32.mrb[0].mxu0
    %v1712 = vpop.f32.mrb[0].mxu0
    %v1713 = vadd.f32 0.0, %v1712
    %v1714 = vpop.f32.mrb[0].mxu0
    %1715 = vmatprep.mubr.bf16.mxu0 0
    %1716 = vmatmul.mubr.bf16.gmra.mrb[0].mxu0 %v1640
    %v1717 = vpop.f32.mrb[0].mxu0
    %v1718 = vadd.f32 0.0, %v1717
    %v1719 = vpop.f32.mrb[0].mxu0
    %v1720 = vpop.f32.mrb[0].mxu0
    %v1721 = vadd.f32 0.0, %v1720
    %v1722 = vpop.f32.mrb[0].mxu0
    %1723 = vmatprep.mubr.bf16.mxu0 0
    %1724 = vmatmul.mubr.bf16.gmra.mrb[0].mxu0 %v1643
    %v1725 = vpop.f32.mrb[0].mxu0
    %v1726 = vadd.f32 0.0, %v1725
    %v1727 = vpop.f32.mrb[0].mxu0
    %v1728 = vpop.f32.mrb[0].mxu0
    %v1729 = vadd.f32 0.0, %v1728
    %v1730 = vpop.f32.mrb[0].mxu0
    %1731 = vmatprep.mubr.bf16.mxu0 0
    %1732 = vmatmul.mubr.bf16.gmra.mrb[0].mxu0 %v1646
    %v1733 = vpop.f32.mrb[0].mxu0
    %v1734 = vadd.f32 0.0, %v1733
    %v1735 = vpop.f32.mrb[0].mxu0
    %v1736 = vpop.f32.mrb[0].mxu0
    %v1737 = vadd.f32 0.0, %v1736
    %v1738 = vpop.f32.mrb[0].mxu0
    %1739 = vmatprep.mubr.bf16.mxu0 0
    %1740 = vmatmul.mubr.bf16.gmra.mrb[0].mxu0 %v1649
    %v1741 = vpop.f32.mrb[0].mxu0
    %v1742 = vadd.f32 0.0, %v1741
    %v1743 = vpop.f32.mrb[0].mxu0
    %v1744 = vpop.f32.mrb[0].mxu0
    %v1745 = vadd.f32 0.0, %v1744
    %v1746 = vpop.f32.mrb[0].mxu0
    %1747 = vdwg.mxu0
    %v1748 = vadd.f32 %v1476, %v1686
    %v1749 = vadd.f32 %v1479, %v1689
    %v1750 = vadd.f32 %v1484, %v1694
    %v1751 = vadd.f32 %v1487, %v1697
    %v1752 = vadd.f32 %v1492, %v1702
    %v1753 = vadd.f32 %v1495, %v1705
    %v1754 = vadd.f32 %v1500, %v1710
    %v1755 = vadd.f32 %v1503, %v1713
    %v1756 = vadd.f32 %v1508, %v1718
    %v1757 = vadd.f32 %v1511, %v1721
    %v1758 = vadd.f32 %v1516, %v1726
    %v1759 = vadd.f32 %v1519, %v1729
    %v1760 = vadd.f32 %v1524, %v1734
    %v1761 = vadd.f32 %v1527, %v1737
    %v1762 = vadd.f32 %v1532, %v1742
    %v1763 = vadd.f32 %v1535, %v1745
    %s1764 = scalar_lea.vmem [#allocation2], 32
    %v1765 = vld [vmem:[%s1764] sm:$0xff]
    %v1766 = vld [vmem:[%s1764 + $0x8] sm:$0x3]
    %v1767 = vld [vmem:[%s1764 + $0x10] sm:$0xff]
    %v1768 = vld [vmem:[%s1764 + $0x18] sm:$0x3]
    %v1769 = vld [vmem:[%s1764 + $0x20] sm:$0xff]
    %v1770 = vld [vmem:[%s1764 + $0x28] sm:$0x3]
    %v1771 = vld [vmem:[%s1764 + $0x30] sm:$0xff]
    %v1772 = vld [vmem:[%s1764 + $0x38] sm:$0x3]
    %v1773 = vld [vmem:[%s1764 + $0x40] sm:$0xff]
    %v1774 = vld [vmem:[%s1764 + $0x48] sm:$0x3]
    %v1775 = vld [vmem:[%s1764 + $0x50] sm:$0xff]
    %v1776 = vld [vmem:[%s1764 + $0x58] sm:$0x3]
    %v1777 = vld [vmem:[%s1764 + $0x60] sm:$0xff]
    %v1778 = vld [vmem:[%s1764 + $0x68] sm:$0x3]
    %v1779 = vld [vmem:[%s1764 + $0x70] sm:$0xff]
    %v1780 = vld [vmem:[%s1764 + $0x78] sm:$0x3]
    %v1781 = vld [vmem:[%s1764 + $0xa0] sm:$0xff]
    %v1782 = vld [vmem:[%s1764 + $0xa8] sm:$0x3]
    %v1783 = vld [vmem:[%s1764 + $0xb0] sm:$0xff]
    %v1784 = vld [vmem:[%s1764 + $0xb8] sm:$0x3]
    %v1785 = vld [vmem:[%s1764 + $0xc0] sm:$0xff]
    %v1786 = vld [vmem:[%s1764 + $0xc8] sm:$0x3]
    %v1787 = vld [vmem:[%s1764 + $0xd0] sm:$0xff]
    %v1788 = vld [vmem:[%s1764 + $0xd8] sm:$0x3]
    %v1789 = vld [vmem:[%s1764 + $0xe0] sm:$0xff]
    %v1790 = vld [vmem:[%s1764 + $0xe8] sm:$0x3]
    %v1791 = vld [vmem:[%s1764 + $0xf0] sm:$0xff]
    %v1792 = vld [vmem:[%s1764 + $0xf8] sm:$0x3]
    %v1793 = vld [vmem:[%s1764 + $0x100] sm:$0xff]
    %v1794 = vld [vmem:[%s1764 + $0x108] sm:$0x3]
    %v1795 = vld [vmem:[%s1764 + $0x110] sm:$0xff]
    %v1796 = vld [vmem:[%s1764 + $0x118] sm:$0x3]
    %v1797 = vpack.c.bf16 %v1767, %v1765
    %v1798 = vpack.c.bf16 %v1771, %v1769
    %v1799 = vpack.c.bf16 %v1775, %v1773
    %v1800 = vpack.c.bf16 %v1779, %v1777
    %v1801 = vpack.c.bf16 %v1783, %v1781
    %v1802 = vpack.c.bf16 %v1787, %v1785
    %v1803 = vpack.c.bf16 %v1791, %v1789
    %v1804 = vpack.c.bf16 %v1795, %v1793
    %s1805 = scalar_lea.vmem [#allocation6], 96
    %v1806 = vld [vmem:[%s1805] sm:$0xf]
    %v1807 = vld [vmem:[%s1805 + $0x4] sm:$0xf]
    %v1808 = vld [vmem:[%s1805 + $0x8] sm:$0xf]
    %v1809 = vld [vmem:[%s1805 + $0xc] sm:$0xf]
    %v1842 = vrot.slane %v1765, 1
    %v1843 = vrot.slane %v1766, 1
    %v1844 = vsel %vm547, %v1842, %v1843
    %v1845 = vrot.slane %v1767, 1
    %v1846 = vrot.slane %v1768, 1
    %v1847 = vsel %vm547, %v1845, %v1846
    %v1848 = vrot.slane %v1769, 1
    %v1849 = vrot.slane %v1770, 1
    %v1850 = vsel %vm547, %v1848, %v1849
    %v1851 = vrot.slane %v1771, 1
    %v1852 = vrot.slane %v1772, 1
    %v1853 = vsel %vm547, %v1851, %v1852
    %v1854 = vrot.slane %v1773, 1
    %v1855 = vrot.slane %v1774, 1
    %v1856 = vsel %vm547, %v1854, %v1855
    %v1857 = vrot.slane %v1775, 1
    %v1858 = vrot.slane %v1776, 1
    %v1859 = vsel %vm547, %v1857, %v1858
    %v1860 = vrot.slane %v1777, 1
    %v1861 = vrot.slane %v1778, 1
    %v1862 = vsel %vm547, %v1860, %v1861
    %v1863 = vrot.slane %v1779, 1
    %v1864 = vrot.slane %v1780, 1
    %v1865 = vsel %vm547, %v1863, %v1864
    %v1866 = vrot.slane %v1781, 1
    %v1867 = vrot.slane %v1782, 1
    %v1868 = vsel %vm547, %v1866, %v1867
    %v1869 = vrot.slane %v1783, 1
    %v1870 = vrot.slane %v1784, 1
    %v1871 = vsel %vm547, %v1869, %v1870
    %v1872 = vrot.slane %v1785, 1
    %v1873 = vrot.slane %v1786, 1
    %v1874 = vsel %vm547, %v1872, %v1873
    %v1875 = vrot.slane %v1787, 1
    %v1876 = vrot.slane %v1788, 1
    %v1877 = vsel %vm547, %v1875, %v1876
    %v1878 = vrot.slane %v1789, 1
    %v1879 = vrot.slane %v1790, 1
    %v1880 = vsel %vm547, %v1878, %v1879
    %v1881 = vrot.slane %v1791, 1
    %v1882 = vrot.slane %v1792, 1
    %v1883 = vsel %vm547, %v1881, %v1882
    %v1884 = vrot.slane %v1793, 1
    %v1885 = vrot.slane %v1794, 1
    %v1886 = vsel %vm547, %v1884, %v1885
    %v1887 = vrot.slane %v1795, 1
    %v1888 = vrot.slane %v1796, 1
    %v1889 = vsel %vm547, %v1887, %v1888
    %v1906 = vpack.c.bf16 %v1847, %v1844
    %v1907 = vpack.c.bf16 %v1853, %v1850
    %v1908 = vpack.c.bf16 %v1859, %v1856
    %v1909 = vpack.c.bf16 %v1865, %v1862
    %v1910 = vpack.c.bf16 %v1871, %v1868
    %v1911 = vpack.c.bf16 %v1877, %v1874
    %v1912 = vpack.c.bf16 %v1883, %v1880
    %v1913 = vpack.c.bf16 %v1889, %v1886
    %s1914 = scalar_lea.vmem [#allocation6], 112
    %v1915 = vld [vmem:[%s1914] sm:$0xf]
    %v1916 = vld [vmem:[%s1914 + $0x4] sm:$0xf]
    %v1917 = vld [vmem:[%s1914 + $0x8] sm:$0xf]
    %v1918 = vld [vmem:[%s1914 + $0xc] sm:$0xf]
    %v1923 = vunpack.c.l.b16 %v1915
    %v1924 = vunpack.c.l.b16 %v1916
    %v1925 = vunpack.c.l.b16 %v1917
    %v1926 = vunpack.c.l.b16 %v1918
    %v1927 = vpack.c.b16 %v1924, %v1923
    %v1928 = vpack.c.b16 %v1926, %v1925
    %v1932 = vsel %vm252, %v1906, 0
    %v1935 = vsel %vm252, %v1907, 0
    %v1938 = vsel %vm252, %v1908, 0
    %v1941 = vsel %vm252, %v1909, 0
    %v1944 = vsel %vm252, %v1910, 0
    %v1947 = vsel %vm252, %v1911, 0
    %v1950 = vsel %vm252, %v1912, 0
    %v1953 = vsel %vm252, %v1913, 0
    %1955 = vmatprep.subr.bf16.mxu0 0
    %1956 = vmatpush1.bf16.msra.mxu0 %v1927
    %1957 = vmatprep.subr.bf16.mxu0 0
    %1958 = vmatpush1.bf16.msra.mxu0 %v1928
    %1959 = vmatprep.subr.bf16.mxu0 0
    %1960 = vmatpush1.bf16.msra.mxu0 0
    %1961 = vmatprep.subr.bf16.mxu0 0
    %1962 = vmatpush1.bf16.msra.mxu0 0
    %1963 = vmatprep.subr.bf16.mxu0 0
    %1964 = vmatpush1.bf16.msra.mxu0 0
    %1965 = vmatprep.subr.bf16.mxu0 0
    %1966 = vmatpush1.bf16.msra.mxu0 0
    %1967 = vmatprep.subr.bf16.mxu0 0
    %1968 = vmatpush1.bf16.msra.mxu0 0
    %1969 = vmatprep.subr.bf16.mxu0 0
    %1970 = vmatpush1.bf16.msra.mxu0 0
    %1971 = vmatprep.subr.bf16.mxu0 0
    %1972 = vmatpush1.bf16.msra.mxu0 0
    %1973 = vmatprep.subr.bf16.mxu0 0
    %1974 = vmatpush1.bf16.msra.mxu0 0
    %1975 = vmatprep.subr.bf16.mxu0 0
    %1976 = vmatpush1.bf16.msra.mxu0 0
    %1977 = vmatprep.subr.bf16.mxu0 0
    %1978 = vmatpush1.bf16.msra.mxu0 0
    %1979 = vmatprep.subr.bf16.mxu0 0
    %1980 = vmatpush1.bf16.msra.mxu0 0
    %1981 = vmatprep.subr.bf16.mxu0 0
    %1982 = vmatpush1.bf16.msra.mxu0 0
    %1983 = vmatprep.subr.bf16.mxu0 0
    %1984 = vmatpush1.bf16.msra.mxu0 0
    %1985 = vmatprep.subr.bf16.mxu0 0
    %1986 = vmatpush1.bf16.msra.mxu0 0
    %1987 = vmatprep.mubr.bf16.mxu0 0
    %1988 = vmatmul.mubr.bf16.gmra.mrb[0].mxu0 %v1932
    %v1989 = vpop.f32.mrb[0].mxu0
    %v1990 = vadd.f32 0.0, %v1989
    %v1991 = vpop.f32.mrb[0].mxu0
    %v1992 = vpop.f32.mrb[0].mxu0
    %v1993 = vadd.f32 0.0, %v1992
    %v1994 = vpop.f32.mrb[0].mxu0
    %1995 = vmatprep.mubr.bf16.mxu0 0
    %1996 = vmatmul.mubr.bf16.gmra.mrb[0].mxu0 %v1935
    %v1997 = vpop.f32.mrb[0].mxu0
    %v1998 = vadd.f32 0.0, %v1997
    %v1999 = vpop.f32.mrb[0].mxu0
    %v2000 = vpop.f32.mrb[0].mxu0
    %v2001 = vadd.f32 0.0, %v2000
    %v2002 = vpop.f32.mrb[0].mxu0
    %2003 = vmatprep.mubr.bf16.mxu0 0
    %2004 = vmatmul.mubr.bf16.gmra.mrb[0].mxu0 %v1938
    %v2005 = vpop.f32.mrb[0].mxu0
    %v2006 = vadd.f32 0.0, %v2005
    %v2007 = vpop.f32.mrb[0].mxu0
    %v2008 = vpop.f32.mrb[0].mxu0
    %v2009 = vadd.f32 0.0, %v2008
    %v2010 = vpop.f32.mrb[0].mxu0
    %2011 = vmatprep.mubr.bf16.mxu0 0
    %2012 = vmatmul.mubr.bf16.gmra.mrb[0].mxu0 %v1941
    %v2013 = vpop.f32.mrb[0].mxu0
    %v2014 = vadd.f32 0.0, %v2013
    %v2015 = vpop.f32.mrb[0].mxu0
    %v2016 = vpop.f32.mrb[0].mxu0
    %v2017 = vadd.f32 0.0, %v2016
    %v2018 = vpop.f32.mrb[0].mxu0
    %2019 = vmatprep.mubr.bf16.mxu0 0
    %2020 = vmatmul.mubr.bf16.gmra.mrb[0].mxu0 %v1944
    %v2021 = vpop.f32.mrb[0].mxu0
    %v2022 = vadd.f32 0.0, %v2021
    %v2023 = vpop.f32.mrb[0].mxu0
    %v2024 = vpop.f32.mrb[0].mxu0
    %v2025 = vadd.f32 0.0, %v2024
    %v2026 = vpop.f32.mrb[0].mxu0
    %2027 = vmatprep.mubr.bf16.mxu0 0
    %2028 = vmatmul.mubr.bf16.gmra.mrb[0].mxu0 %v1947
    %v2029 = vpop.f32.mrb[0].mxu0
    %v2030 = vadd.f32 0.0, %v2029
    %v2031 = vpop.f32.mrb[0].mxu0
    %v2032 = vpop.f32.mrb[0].mxu0
    %v2033 = vadd.f32 0.0, %v2032
    %v2034 = vpop.f32.mrb[0].mxu0
    %2035 = vmatprep.mubr.bf16.mxu0 0
    %2036 = vmatmul.mubr.bf16.gmra.mrb[0].mxu0 %v1950
    %v2037 = vpop.f32.mrb[0].mxu0
    %v2038 = vadd.f32 0.0, %v2037
    %v2039 = vpop.f32.mrb[0].mxu0
    %v2040 = vpop.f32.mrb[0].mxu0
    %v2041 = vadd.f32 0.0, %v2040
    %v2042 = vpop.f32.mrb[0].mxu0
    %2043 = vmatprep.mubr.bf16.mxu0 0
    %2044 = vmatmul.mubr.bf16.gmra.mrb[0].mxu0 %v1953
    %v2045 = vpop.f32.mrb[0].mxu0
    %v2046 = vadd.f32 0.0, %v2045
    %v2047 = vpop.f32.mrb[0].mxu0
    %v2048 = vpop.f32.mrb[0].mxu0
    %v2049 = vadd.f32 0.0, %v2048
    %v2050 = vpop.f32.mrb[0].mxu0
    %2051 = vdwg.mxu0
    %v2056 = vunpack.c.l.b16 %v1806
    %v2057 = vunpack.c.l.b16 %v1807
    %v2058 = vunpack.c.l.b16 %v1808
    %v2059 = vunpack.c.l.b16 %v1809
    %v2060 = vpack.c.b16 %v2057, %v2056
    %v2061 = vpack.c.b16 %v2059, %v2058
    %v2065 = vsel %vm252, %v1797, 0
    %v2068 = vsel %vm252, %v1798, 0
    %v2071 = vsel %vm252, %v1799, 0
    %v2074 = vsel %vm252, %v1800, 0
    %v2077 = vsel %vm252, %v1801, 0
    %v2080 = vsel %vm252, %v1802, 0
    %v2083 = vsel %vm252, %v1803, 0
    %v2086 = vsel %vm252, %v1804, 0
    %2088 = vmatprep.subr.bf16.mxu0 0
    %2089 = vmatpush1.bf16.msra.mxu0 %v2060
    %2090 = vmatprep.subr.bf16.mxu0 0
    %2091 = vmatpush1.bf16.msra.mxu0 %v2061
    %2092 = vmatprep.subr.bf16.mxu0 0
    %2093 = vmatpush1.bf16.msra.mxu0 0
    %2094 = vmatprep.subr.bf16.mxu0 0
    %2095 = vmatpush1.bf16.msra.mxu0 0
    %2096 = vmatprep.subr.bf16.mxu0 0
    %2097 = vmatpush1.bf16.msra.mxu0 0
    %2098 = vmatprep.subr.bf16.mxu0 0
    %2099 = vmatpush1.bf16.msra.mxu0 0
    %2100 = vmatprep.subr.bf16.mxu0 0
    %2101 = vmatpush1.bf16.msra.mxu0 0
    %2102 = vmatprep.subr.bf16.mxu0 0
    %2103 = vmatpush1.bf16.msra.mxu0 0
    %2104 = vmatprep.subr.bf16.mxu0 0
    %2105 = vmatpush1.bf16.msra.mxu0 0
    %2106 = vmatprep.subr.bf16.mxu0 0
    %2107 = vmatpush1.bf16.msra.mxu0 0
    %2108 = vmatprep.subr.bf16.mxu0 0
    %2109 = vmatpush1.bf16.msra.mxu0 0
    %2110 = vmatprep.subr.bf16.mxu0 0
    %2111 = vmatpush1.bf16.msra.mxu0 0
    %2112 = vmatprep.subr.bf16.mxu0 0
    %2113 = vmatpush1.bf16.msra.mxu0 0
    %2114 = vmatprep.subr.bf16.mxu0 0
    %2115 = vmatpush1.bf16.msra.mxu0 0
    %2116 = vmatprep.subr.bf16.mxu0 0
    %2117 = vmatpush1.bf16.msra.mxu0 0
    %2118 = vmatprep.subr.bf16.mxu0 0
    %2119 = vmatpush1.bf16.msra.mxu0 0
    %2120 = vmatprep.mubr.bf16.mxu0 0
    %2121 = vmatmul.mubr.bf16.gmra.mrb[0].mxu0 %v2065
    %v2122 = vpop.f32.mrb[0].mxu0
    %v2123 = vadd.f32 %v1990, %v2122
    %v2124 = vpop.f32.mrb[0].mxu0
    %v2125 = vpop.f32.mrb[0].mxu0
    %v2126 = vadd.f32 %v1993, %v2125
    %v2127 = vpop.f32.mrb[0].mxu0
    %2128 = vmatprep.mubr.bf16.mxu0 0
    %2129 = vmatmul.mubr.bf16.gmra.mrb[0].mxu0 %v2068
    %v2130 = vpop.f32.mrb[0].mxu0
    %v2131 = vadd.f32 %v1998, %v2130
    %v2132 = vpop.f32.mrb[0].mxu0
    %v2133 = vpop.f32.mrb[0].mxu0
    %v2134 = vadd.f32 %v2001, %v2133
    %v2135 = vpop.f32.mrb[0].mxu0
    %2136 = vmatprep.mubr.bf16.mxu0 0
    %2137 = vmatmul.mubr.bf16.gmra.mrb[0].mxu0 %v2071
    %v2138 = vpop.f32.mrb[0].mxu0
    %v2139 = vadd.f32 %v2006, %v2138
    %v2140 = vpop.f32.mrb[0].mxu0
    %v2141 = vpop.f32.mrb[0].mxu0
    %v2142 = vadd.f32 %v2009, %v2141
    %v2143 = vpop.f32.mrb[0].mxu0
    %2144 = vmatprep.mubr.bf16.mxu0 0
    %2145 = vmatmul.mubr.bf16.gmra.mrb[0].mxu0 %v2074
    %v2146 = vpop.f32.mrb[0].mxu0
    %v2147 = vadd.f32 %v2014, %v2146
    %v2148 = vpop.f32.mrb[0].mxu0
    %v2149 = vpop.f32.mrb[0].mxu0
    %v2150 = vadd.f32 %v2017, %v2149
    %v2151 = vpop.f32.mrb[0].mxu0
    %2152 = vmatprep.mubr.bf16.mxu0 0
    %2153 = vmatmul.mubr.bf16.gmra.mrb[0].mxu0 %v2077
    %v2154 = vpop.f32.mrb[0].mxu0
    %v2155 = vadd.f32 %v2022, %v2154
    %v2156 = vpop.f32.mrb[0].mxu0
    %v2157 = vpop.f32.mrb[0].mxu0
    %v2158 = vadd.f32 %v2025, %v2157
    %v2159 = vpop.f32.mrb[0].mxu0
    %2160 = vmatprep.mubr.bf16.mxu0 0
    %2161 = vmatmul.mubr.bf16.gmra.mrb[0].mxu0 %v2080
    %v2162 = vpop.f32.mrb[0].mxu0
    %v2163 = vadd.f32 %v2030, %v2162
    %v2164 = vpop.f32.mrb[0].mxu0
    %v2165 = vpop.f32.mrb[0].mxu0
    %v2166 = vadd.f32 %v2033, %v2165
    %v2167 = vpop.f32.mrb[0].mxu0
    %2168 = vmatprep.mubr.bf16.mxu0 0
    %2169 = vmatmul.mubr.bf16.gmra.mrb[0].mxu0 %v2083
    %v2170 = vpop.f32.mrb[0].mxu0
    %v2171 = vadd.f32 %v2038, %v2170
    %v2172 = vpop.f32.mrb[0].mxu0
    %v2173 = vpop.f32.mrb[0].mxu0
    %v2174 = vadd.f32 %v2041, %v2173
    %v2175 = vpop.f32.mrb[0].mxu0
    %2176 = vmatprep.mubr.bf16.mxu0 0
    %2177 = vmatmul.mubr.bf16.gmra.mrb[0].mxu0 %v2086
    %v2178 = vpop.f32.mrb[0].mxu0
    %v2179 = vadd.f32 %v2046, %v2178
    %v2180 = vpop.f32.mrb[0].mxu0
    %v2181 = vpop.f32.mrb[0].mxu0
    %v2182 = vadd.f32 %v2049, %v2181
    %v2183 = vpop.f32.mrb[0].mxu0
    %2184 = vdwg.mxu0
    %v2185 = vrot.slane %v1765, 2
    %v2186 = vrot.slane %v1766, 2
    %v2187 = vsel %vm891, %v2185, %v2186
    %v2188 = vrot.slane %v1767, 2
    %v2189 = vrot.slane %v1768, 2
    %v2190 = vsel %vm891, %v2188, %v2189
    %v2191 = vrot.slane %v1769, 2
    %v2192 = vrot.slane %v1770, 2
    %v2193 = vsel %vm891, %v2191, %v2192
    %v2194 = vrot.slane %v1771, 2
    %v2195 = vrot.slane %v1772, 2
    %v2196 = vsel %vm891, %v2194, %v2195
    %v2197 = vrot.slane %v1773, 2
    %v2198 = vrot.slane %v1774, 2
    %v2199 = vsel %vm891, %v2197, %v2198
    %v2200 = vrot.slane %v1775, 2
    %v2201 = vrot.slane %v1776, 2
    %v2202 = vsel %vm891, %v2200, %v2201
    %v2203 = vrot.slane %v1777, 2
    %v2204 = vrot.slane %v1778, 2
    %v2205 = vsel %vm891, %v2203, %v2204
    %v2206 = vrot.slane %v1779, 2
    %v2207 = vrot.slane %v1780, 2
    %v2208 = vsel %vm891, %v2206, %v2207
    %v2209 = vrot.slane %v1781, 2
    %v2210 = vrot.slane %v1782, 2
    %v2211 = vsel %vm891, %v2209, %v2210
    %v2212 = vrot.slane %v1783, 2
    %v2213 = vrot.slane %v1784, 2
    %v2214 = vsel %vm891, %v2212, %v2213
    %v2215 = vrot.slane %v1785, 2
    %v2216 = vrot.slane %v1786, 2
    %v2217 = vsel %vm891, %v2215, %v2216
    %v2218 = vrot.slane %v1787, 2
    %v2219 = vrot.slane %v1788, 2
    %v2220 = vsel %vm891, %v2218, %v2219
    %v2221 = vrot.slane %v1789, 2
    %v2222 = vrot.slane %v1790, 2
    %v2223 = vsel %vm891, %v2221, %v2222
    %v2224 = vrot.slane %v1791, 2
    %v2225 = vrot.slane %v1792, 2
    %v2226 = vsel %vm891, %v2224, %v2225
    %v2227 = vrot.slane %v1793, 2
    %v2228 = vrot.slane %v1794, 2
    %v2229 = vsel %vm891, %v2227, %v2228
    %v2230 = vrot.slane %v1795, 2
    %v2231 = vrot.slane %v1796, 2
    %v2232 = vsel %vm891, %v2230, %v2231
    %v2249 = vpack.c.bf16 %v2190, %v2187
    %v2250 = vpack.c.bf16 %v2196, %v2193
    %v2251 = vpack.c.bf16 %v2202, %v2199
    %v2252 = vpack.c.bf16 %v2208, %v2205
    %v2253 = vpack.c.bf16 %v2214, %v2211
    %v2254 = vpack.c.bf16 %v2220, %v2217
    %v2255 = vpack.c.bf16 %v2226, %v2223
    %v2256 = vpack.c.bf16 %v2232, %v2229
    %s2257 = scalar_lea.vmem [#allocation6], 128
    %v2258 = vld [vmem:[%s2257] sm:$0xf]
    %v2259 = vld [vmem:[%s2257 + $0x4] sm:$0xf]
    %v2260 = vld [vmem:[%s2257 + $0x8] sm:$0xf]
    %v2261 = vld [vmem:[%s2257 + $0xc] sm:$0xf]
    %v2266 = vunpack.c.l.b16 %v2258
    %v2267 = vunpack.c.l.b16 %v2259
    %v2268 = vunpack.c.l.b16 %v2260
    %v2269 = vunpack.c.l.b16 %v2261
    %v2270 = vpack.c.b16 %v2267, %v2266
    %v2271 = vpack.c.b16 %v2269, %v2268
    %v2275 = vsel %vm252, %v2249, 0
    %v2278 = vsel %vm252, %v2250, 0
    %v2281 = vsel %vm252, %v2251, 0
    %v2284 = vsel %vm252, %v2252, 0
    %v2287 = vsel %vm252, %v2253, 0
    %v2290 = vsel %vm252, %v2254, 0
    %v2293 = vsel %vm252, %v2255, 0
    %v2296 = vsel %vm252, %v2256, 0
    %2298 = vmatprep.subr.bf16.mxu0 0
    %2299 = vmatpush1.bf16.msra.mxu0 %v2270
    %2300 = vmatprep.subr.bf16.mxu0 0
    %2301 = vmatpush1.bf16.msra.mxu0 %v2271
    %2302 = vmatprep.subr.bf16.mxu0 0
    %2303 = vmatpush1.bf16.msra.mxu0 0
    %2304 = vmatprep.subr.bf16.mxu0 0
    %2305 = vmatpush1.bf16.msra.mxu0 0
    %2306 = vmatprep.subr.bf16.mxu0 0
    %2307 = vmatpush1.bf16.msra.mxu0 0
    %2308 = vmatprep.subr.bf16.mxu0 0
    %2309 = vmatpush1.bf16.msra.mxu0 0
    %2310 = vmatprep.subr.bf16.mxu0 0
    %2311 = vmatpush1.bf16.msra.mxu0 0
    %2312 = vmatprep.subr.bf16.mxu0 0
    %2313 = vmatpush1.bf16.msra.mxu0 0
    %2314 = vmatprep.subr.bf16.mxu0 0
    %2315 = vmatpush1.bf16.msra.mxu0 0
    %2316 = vmatprep.subr.bf16.mxu0 0
    %2317 = vmatpush1.bf16.msra.mxu0 0
    %2318 = vmatprep.subr.bf16.mxu0 0
    %2319 = vmatpush1.bf16.msra.mxu0 0
    %2320 = vmatprep.subr.bf16.mxu0 0
    %2321 = vmatpush1.bf16.msra.mxu0 0
    %2322 = vmatprep.subr.bf16.mxu0 0
    %2323 = vmatpush1.bf16.msra.mxu0 0
    %2324 = vmatprep.subr.bf16.mxu0 0
    %2325 = vmatpush1.bf16.msra.mxu0 0
    %2326 = vmatprep.subr.bf16.mxu0 0
    %2327 = vmatpush1.bf16.msra.mxu0 0
    %2328 = vmatprep.subr.bf16.mxu0 0
    %2329 = vmatpush1.bf16.msra.mxu0 0
    %2330 = vmatprep.mubr.bf16.mxu0 0
    %2331 = vmatmul.mubr.bf16.gmra.mrb[0].mxu0 %v2275
    %v2332 = vpop.f32.mrb[0].mxu0
    %v2333 = vadd.f32 0.0, %v2332
    %v2334 = vpop.f32.mrb[0].mxu0
    %v2335 = vpop.f32.mrb[0].mxu0
    %v2336 = vadd.f32 0.0, %v2335
    %v2337 = vpop.f32.mrb[0].mxu0
    %2338 = vmatprep.mubr.bf16.mxu0 0
    %2339 = vmatmul.mubr.bf16.gmra.mrb[0].mxu0 %v2278
    %v2340 = vpop.f32.mrb[0].mxu0
    %v2341 = vadd.f32 0.0, %v2340
    %v2342 = vpop.f32.mrb[0].mxu0
    %v2343 = vpop.f32.mrb[0].mxu0
    %v2344 = vadd.f32 0.0, %v2343
    %v2345 = vpop.f32.mrb[0].mxu0
    %2346 = vmatprep.mubr.bf16.mxu0 0
    %2347 = vmatmul.mubr.bf16.gmra.mrb[0].mxu0 %v2281
    %v2348 = vpop.f32.mrb[0].mxu0
    %v2349 = vadd.f32 0.0, %v2348
    %v2350 = vpop.f32.mrb[0].mxu0
    %v2351 = vpop.f32.mrb[0].mxu0
    %v2352 = vadd.f32 0.0, %v2351
    %v2353 = vpop.f32.mrb[0].mxu0
    %2354 = vmatprep.mubr.bf16.mxu0 0
    %2355 = vmatmul.mubr.bf16.gmra.mrb[0].mxu0 %v2284
    %v2356 = vpop.f32.mrb[0].mxu0
    %v2357 = vadd.f32 0.0, %v2356
    %v2358 = vpop.f32.mrb[0].mxu0
    %v2359 = vpop.f32.mrb[0].mxu0
    %v2360 = vadd.f32 0.0, %v2359
    %v2361 = vpop.f32.mrb[0].mxu0
    %2362 = vmatprep.mubr.bf16.mxu0 0
    %2363 = vmatmul.mubr.bf16.gmra.mrb[0].mxu0 %v2287
    %v2364 = vpop.f32.mrb[0].mxu0
    %v2365 = vadd.f32 0.0, %v2364
    %v2366 = vpop.f32.mrb[0].mxu0
    %v2367 = vpop.f32.mrb[0].mxu0
    %v2368 = vadd.f32 0.0, %v2367
    %v2369 = vpop.f32.mrb[0].mxu0
    %2370 = vmatprep.mubr.bf16.mxu0 0
    %2371 = vmatmul.mubr.bf16.gmra.mrb[0].mxu0 %v2290
    %v2372 = vpop.f32.mrb[0].mxu0
    %v2373 = vadd.f32 0.0, %v2372
    %v2374 = vpop.f32.mrb[0].mxu0
    %v2375 = vpop.f32.mrb[0].mxu0
    %v2376 = vadd.f32 0.0, %v2375
    %v2377 = vpop.f32.mrb[0].mxu0
    %2378 = vmatprep.mubr.bf16.mxu0 0
    %2379 = vmatmul.mubr.bf16.gmra.mrb[0].mxu0 %v2293
    %v2380 = vpop.f32.mrb[0].mxu0
    %v2381 = vadd.f32 0.0, %v2380
    %v2382 = vpop.f32.mrb[0].mxu0
    %v2383 = vpop.f32.mrb[0].mxu0
    %v2384 = vadd.f32 0.0, %v2383
    %v2385 = vpop.f32.mrb[0].mxu0
    %2386 = vmatprep.mubr.bf16.mxu0 0
    %2387 = vmatmul.mubr.bf16.gmra.mrb[0].mxu0 %v2296
    %v2388 = vpop.f32.mrb[0].mxu0
    %v2389 = vadd.f32 0.0, %v2388
    %v2390 = vpop.f32.mrb[0].mxu0
    %v2391 = vpop.f32.mrb[0].mxu0
    %v2392 = vadd.f32 0.0, %v2391
    %v2393 = vpop.f32.mrb[0].mxu0
    %2394 = vdwg.mxu0
    %v2395 = vadd.f32 %v2123, %v2333
    %v2396 = vadd.f32 %v2126, %v2336
    %v2397 = vadd.f32 %v2131, %v2341
    %v2398 = vadd.f32 %v2134, %v2344
    %v2399 = vadd.f32 %v2139, %v2349
    %v2400 = vadd.f32 %v2142, %v2352
    %v2401 = vadd.f32 %v2147, %v2357
    %v2402 = vadd.f32 %v2150, %v2360
    %v2403 = vadd.f32 %v2155, %v2365
    %v2404 = vadd.f32 %v2158, %v2368
    %v2405 = vadd.f32 %v2163, %v2373
    %v2406 = vadd.f32 %v2166, %v2376
    %v2407 = vadd.f32 %v2171, %v2381
    %v2408 = vadd.f32 %v2174, %v2384
    %v2409 = vadd.f32 %v2179, %v2389
    %v2410 = vadd.f32 %v2182, %v2392
    %v2411 = vadd.f32 %v1102, %v1748
    %v2412 = vadd.f32 %v1103, %v1749
    %v2413 = vadd.f32 %v1104, %v1750
    %v2414 = vadd.f32 %v1105, %v1751
    %v2415 = vadd.f32 %v1106, %v1752
    %v2416 = vadd.f32 %v1107, %v1753
    %v2417 = vadd.f32 %v1108, %v1754
    %v2418 = vadd.f32 %v1109, %v1755
    %v2419 = vadd.f32 %v1110, %v1756
    %v2420 = vadd.f32 %v1111, %v1757
    %v2421 = vadd.f32 %v1112, %v1758
    %v2422 = vadd.f32 %v1113, %v1759
    %v2423 = vadd.f32 %v1114, %v1760
    %v2424 = vadd.f32 %v1115, %v1761
    %v2425 = vadd.f32 %v1116, %v1762
    %v2426 = vadd.f32 %v1117, %v1763
    %v2427 = vadd.f32 %v2411, %v2395
    %v2428 = vadd.f32 %v2412, %v2396
    %v2429 = vadd.f32 %v2413, %v2397
    %v2430 = vadd.f32 %v2414, %v2398
    %v2431 = vadd.f32 %v2415, %v2399
    %v2432 = vadd.f32 %v2416, %v2400
    %v2433 = vadd.f32 %v2417, %v2401
    %v2434 = vadd.f32 %v2418, %v2402
    %v2435 = vadd.f32 %v2419, %v2403
    %v2436 = vadd.f32 %v2420, %v2404
    %v2437 = vadd.f32 %v2421, %v2405
    %v2438 = vadd.f32 %v2422, %v2406
    %v2439 = vadd.f32 %v2423, %v2407
    %v2440 = vadd.f32 %v2424, %v2408
    %v2441 = vadd.f32 %v2425, %v2409
    %v2442 = vadd.f32 %v2426, %v2410
    %v2443 = vld [vmem:[%s6] sm:$0x1]
    %v2444 = vld [vmem:[%s7] sm:$0x1]
    %v2445 = vsel %vm252, %v2427, 0.0
    %v2446 = vsel %vm252, %v2428, 0.0
    %v2447 = vadd.f32 %v2445, %v2446
    %v2448 = vsel %vm252, %v2429, 0.0
    %v2449 = vadd.f32 %v2447, %v2448
    %v2450 = vsel %vm252, %v2430, 0.0
    %v2451 = vadd.f32 %v2449, %v2450
    %v2452 = vsel %vm252, %v2431, 0.0
    %v2453 = vadd.f32 %v2451, %v2452
    %v2454 = vsel %vm252, %v2432, 0.0
    %v2455 = vadd.f32 %v2453, %v2454
    %v2456 = vsel %vm252, %v2433, 0.0
    %v2457 = vadd.f32 %v2455, %v2456
    %v2458 = vsel %vm252, %v2434, 0.0
    %v2459 = vadd.f32 %v2457, %v2458
    %v2460 = vsel %vm252, %v2435, 0.0
    %v2461 = vadd.f32 %v2459, %v2460
    %v2462 = vsel %vm252, %v2436, 0.0
    %v2463 = vadd.f32 %v2461, %v2462
    %v2464 = vsel %vm252, %v2437, 0.0
    %v2465 = vadd.f32 %v2463, %v2464
    %v2466 = vsel %vm252, %v2438, 0.0
    %v2467 = vadd.f32 %v2465, %v2466
    %v2468 = vsel %vm252, %v2439, 0.0
    %v2469 = vadd.f32 %v2467, %v2468
    %v2470 = vsel %vm252, %v2440, 0.0
    %v2471 = vadd.f32 %v2469, %v2470
    %v2472 = vsel %vm252, %v2441, 0.0
    %v2473 = vadd.f32 %v2471, %v2472
    %v2474 = vsel %vm252, %v2442, 0.0
    %v2475 = vadd.f32 %v2473, %v2474
    %v2476 = vrot.slane %v2475, 4
    %v2477 = vadd.f32 %v2475, %v2476
    %v2478 = vrot.slane %v2477, 2
    %v2479 = vadd.f32 %v2477, %v2478
    %v2480 = vrot.slane %v2479, 1
    %v2481 = vadd.f32 %v2479, %v2480
    %v2482 = vmul.f32 %v2427, %v2427
    %v2483 = vmul.f32 %v2428, %v2428
    %v2484 = vmul.f32 %v2429, %v2429
    %v2485 = vmul.f32 %v2430, %v2430
    %v2486 = vmul.f32 %v2431, %v2431
    %v2487 = vmul.f32 %v2432, %v2432
    %v2488 = vmul.f32 %v2433, %v2433
    %v2489 = vmul.f32 %v2434, %v2434
    %v2490 = vmul.f32 %v2435, %v2435
    %v2491 = vmul.f32 %v2436, %v2436
    %v2492 = vmul.f32 %v2437, %v2437
    %v2493 = vmul.f32 %v2438, %v2438
    %v2494 = vmul.f32 %v2439, %v2439
    %v2495 = vmul.f32 %v2440, %v2440
    %v2496 = vmul.f32 %v2441, %v2441
    %v2497 = vmul.f32 %v2442, %v2442
    %v2498 = vsel %vm252, %v2482, 0.0
    %v2499 = vsel %vm252, %v2483, 0.0
    %v2500 = vadd.f32 %v2498, %v2499
    %v2501 = vsel %vm252, %v2484, 0.0
    %v2502 = vadd.f32 %v2500, %v2501
    %v2503 = vsel %vm252, %v2485, 0.0
    %v2504 = vadd.f32 %v2502, %v2503
    %v2505 = vsel %vm252, %v2486, 0.0
    %v2506 = vadd.f32 %v2504, %v2505
    %v2507 = vsel %vm252, %v2487, 0.0
    %v2508 = vadd.f32 %v2506, %v2507
    %v2509 = vsel %vm252, %v2488, 0.0
    %v2510 = vadd.f32 %v2508, %v2509
    %v2511 = vsel %vm252, %v2489, 0.0
    %v2512 = vadd.f32 %v2510, %v2511
    %v2513 = vsel %vm252, %v2490, 0.0
    %v2514 = vadd.f32 %v2512, %v2513
    %v2515 = vsel %vm252, %v2491, 0.0
    %v2516 = vadd.f32 %v2514, %v2515
    %v2517 = vsel %vm252, %v2492, 0.0
    %v2518 = vadd.f32 %v2516, %v2517
    %v2519 = vsel %vm252, %v2493, 0.0
    %v2520 = vadd.f32 %v2518, %v2519
    %v2521 = vsel %vm252, %v2494, 0.0
    %v2522 = vadd.f32 %v2520, %v2521
    %v2523 = vsel %vm252, %v2495, 0.0
    %v2524 = vadd.f32 %v2522, %v2523
    %v2525 = vsel %vm252, %v2496, 0.0
    %v2526 = vadd.f32 %v2524, %v2525
    %v2527 = vsel %vm252, %v2497, 0.0
    %v2528 = vadd.f32 %v2526, %v2527
    %v2529 = vrot.slane %v2528, 4
    %v2530 = vadd.f32 %v2528, %v2529
    %v2531 = vrot.slane %v2530, 2
    %v2532 = vadd.f32 %v2530, %v2531
    %v2533 = vrot.slane %v2532, 1
    %v2534 = vadd.f32 %v2532, %v2533
    %v2535 = vmul.f32 %v2481, 0.0078125
    %v2536 = vmul.f32 %v2534, 0.0078125
    %v2537 = vmul.f32 %v2535, %v2535
    %v2538 = vsub.f32 %v2536, %v2537
    %v2539 = vmax.f32 %v2538, 0.0
    %v2540 = vadd.f32 %v2539, 1e-05
    %v2541 = vrsqrt.pop %v2540
    %v2542 = vmul.f32 %v2443, %v2541
    %v2543 = vmul.f32 %v2535, %v2542
    %v2544 = vsub.f32 %v2444, %v2543
    %v2546 = vlaneseq
    %v2547 = vshrl.u32 %v2546, 7
    %v2548 = vsub.s32 0, %v2547
    %v2549 = vrot.slane %v2542, %v2548
    %v2551 = vmul.f32 %v2427, %v2549
    %v2552 = vmul.f32 %v2428, %v2549
    %v2553 = vmul.f32 %v2429, %v2549
    %v2554 = vmul.f32 %v2430, %v2549
    %v2555 = vmul.f32 %v2431, %v2549
    %v2556 = vmul.f32 %v2432, %v2549
    %v2557 = vmul.f32 %v2433, %v2549
    %v2558 = vmul.f32 %v2434, %v2549
    %v2559 = vmul.f32 %v2435, %v2549
    %v2560 = vmul.f32 %v2436, %v2549
    %v2561 = vmul.f32 %v2437, %v2549
    %v2562 = vmul.f32 %v2438, %v2549
    %v2563 = vmul.f32 %v2439, %v2549
    %v2564 = vmul.f32 %v2440, %v2549
    %v2565 = vmul.f32 %v2441, %v2549
    %v2566 = vmul.f32 %v2442, %v2549
    %v2568 = vlaneseq
    %v2569 = vshrl.u32 %v2568, 7
    %v2570 = vsub.s32 0, %v2569
    %v2571 = vrot.slane %v2544, %v2570
    %v2573 = vadd.f32 %v2551, %v2571
    %v2574 = vadd.f32 %v2552, %v2571
    %v2575 = vadd.f32 %v2553, %v2571
    %v2576 = vadd.f32 %v2554, %v2571
    %v2577 = vadd.f32 %v2555, %v2571
    %v2578 = vadd.f32 %v2556, %v2571
    %v2579 = vadd.f32 %v2557, %v2571
    %v2580 = vadd.f32 %v2558, %v2571
    %v2581 = vadd.f32 %v2559, %v2571
    %v2582 = vadd.f32 %v2560, %v2571
    %v2583 = vadd.f32 %v2561, %v2571
    %v2584 = vadd.f32 %v2562, %v2571
    %v2585 = vadd.f32 %v2563, %v2571
    %v2586 = vadd.f32 %v2564, %v2571
    %v2587 = vadd.f32 %v2565, %v2571
    %v2588 = vadd.f32 %v2566, %v2571
    %v2589 = vmax.f32 %v2573, 0.0
    %v2590 = vmax.f32 %v2574, 0.0
    %v2591 = vmax.f32 %v2575, 0.0
    %v2592 = vmax.f32 %v2576, 0.0
    %v2593 = vmax.f32 %v2577, 0.0
    %v2594 = vmax.f32 %v2578, 0.0
    %v2595 = vmax.f32 %v2579, 0.0
    %v2596 = vmax.f32 %v2580, 0.0
    %v2597 = vmax.f32 %v2581, 0.0
    %v2598 = vmax.f32 %v2582, 0.0
    %v2599 = vmax.f32 %v2583, 0.0
    %v2600 = vmax.f32 %v2584, 0.0
    %v2601 = vmax.f32 %v2585, 0.0
    %v2602 = vmax.f32 %v2586, 0.0
    %v2603 = vmax.f32 %v2587, 0.0
    %v2604 = vmax.f32 %v2588, 0.0
    %v2605 = vpack.c.bf16 %v2590, %v2589
    %v2606 = vpack.c.bf16 %v2592, %v2591
    %v2607 = vpack.c.bf16 %v2594, %v2593
    %v2608 = vpack.c.bf16 %v2596, %v2595
    %v2609 = vpack.c.bf16 %v2598, %v2597
    %v2610 = vpack.c.bf16 %v2600, %v2599
    %v2611 = vpack.c.bf16 %v2602, %v2601
    %v2612 = vpack.c.bf16 %v2604, %v2603
    %v2613 = vld [vmem:[%s3] sm:$0xf]
    %v2614 = vld [vmem:[%s3 + $0x4] sm:$0xf]
    %v2615 = vld [vmem:[%s3 + $0x8] sm:$0xf]
    %v2616 = vld [vmem:[%s3 + $0xc] sm:$0xf]
    %v2621 = vunpack.c.l.b16 %v2613
    %v2622 = vunpack.c.l.b16 %v2614
    %v2623 = vunpack.c.l.b16 %v2615
    %v2624 = vunpack.c.l.b16 %v2616
    %v2625 = vpack.c.b16 %v2622, %v2621
    %v2626 = vpack.c.b16 %v2624, %v2623
    %v2630 = vsel %vm252, %v2605, 0
    %v2633 = vsel %vm252, %v2606, 0
    %v2636 = vsel %vm252, %v2607, 0
    %v2639 = vsel %vm252, %v2608, 0
    %v2642 = vsel %vm252, %v2609, 0
    %v2645 = vsel %vm252, %v2610, 0
    %v2648 = vsel %vm252, %v2611, 0
    %v2651 = vsel %vm252, %v2612, 0
    %2653 = vmatprep.subr.bf16.mxu0 0
    %2654 = vmatpush1.bf16.msra.mxu0 %v2625
    %2655 = vmatprep.subr.bf16.mxu0 0
    %2656 = vmatpush1.bf16.msra.mxu0 %v2626
    %2657 = vmatprep.subr.bf16.mxu0 0
    %2658 = vmatpush1.bf16.msra.mxu0 0
    %2659 = vmatprep.subr.bf16.mxu0 0
    %2660 = vmatpush1.bf16.msra.mxu0 0
    %2661 = vmatprep.subr.bf16.mxu0 0
    %2662 = vmatpush1.bf16.msra.mxu0 0
    %2663 = vmatprep.subr.bf16.mxu0 0
    %2664 = vmatpush1.bf16.msra.mxu0 0
    %2665 = vmatprep.subr.bf16.mxu0 0
    %2666 = vmatpush1.bf16.msra.mxu0 0
    %2667 = vmatprep.subr.bf16.mxu0 0
    %2668 = vmatpush1.bf16.msra.mxu0 0
    %2669 = vmatprep.subr.bf16.mxu0 0
    %2670 = vmatpush1.bf16.msra.mxu0 0
    %2671 = vmatprep.subr.bf16.mxu0 0
    %2672 = vmatpush1.bf16.msra.mxu0 0
    %2673 = vmatprep.subr.bf16.mxu0 0
    %2674 = vmatpush1.bf16.msra.mxu0 0
    %2675 = vmatprep.subr.bf16.mxu0 0
    %2676 = vmatpush1.bf16.msra.mxu0 0
    %2677 = vmatprep.subr.bf16.mxu0 0
    %2678 = vmatpush1.bf16.msra.mxu0 0
    %2679 = vmatprep.subr.bf16.mxu0 0
    %2680 = vmatpush1.bf16.msra.mxu0 0
    %2681 = vmatprep.subr.bf16.mxu0 0
    %2682 = vmatpush1.bf16.msra.mxu0 0
    %2683 = vmatprep.subr.bf16.mxu0 0
    %2684 = vmatpush1.bf16.msra.mxu0 0
    %2685 = vmatprep.mubr.bf16.mxu0 0
    %2686 = vmatmul.mubr.bf16.gmra.mrb[0].mxu0 %v2630
    %v2687 = vpop.f32.mrb[0].mxu0
    %v2688 = vadd.f32 0.0, %v2687
    %v2689 = vpop.f32.mrb[0].mxu0
    %v2690 = vpop.f32.mrb[0].mxu0
    %v2691 = vadd.f32 0.0, %v2690
    %v2692 = vpop.f32.mrb[0].mxu0
    %2693 = vmatprep.mubr.bf16.mxu0 0
    %2694 = vmatmul.mubr.bf16.gmra.mrb[0].mxu0 %v2633
    %v2695 = vpop.f32.mrb[0].mxu0
    %v2696 = vadd.f32 0.0, %v2695
    %v2697 = vpop.f32.mrb[0].mxu0
    %v2698 = vpop.f32.mrb[0].mxu0
    %v2699 = vadd.f32 0.0, %v2698
    %v2700 = vpop.f32.mrb[0].mxu0
    %2701 = vmatprep.mubr.bf16.mxu0 0
    %2702 = vmatmul.mubr.bf16.gmra.mrb[0].mxu0 %v2636
    %v2703 = vpop.f32.mrb[0].mxu0
    %v2704 = vadd.f32 0.0, %v2703
    %v2705 = vpop.f32.mrb[0].mxu0
    %v2706 = vpop.f32.mrb[0].mxu0
    %v2707 = vadd.f32 0.0, %v2706
    %v2708 = vpop.f32.mrb[0].mxu0
    %2709 = vmatprep.mubr.bf16.mxu0 0
    %2710 = vmatmul.mubr.bf16.gmra.mrb[0].mxu0 %v2639
    %v2711 = vpop.f32.mrb[0].mxu0
    %v2712 = vadd.f32 0.0, %v2711
    %v2713 = vpop.f32.mrb[0].mxu0
    %v2714 = vpop.f32.mrb[0].mxu0
    %v2715 = vadd.f32 0.0, %v2714
    %v2716 = vpop.f32.mrb[0].mxu0
    %2717 = vmatprep.mubr.bf16.mxu0 0
    %2718 = vmatmul.mubr.bf16.gmra.mrb[0].mxu0 %v2642
    %v2719 = vpop.f32.mrb[0].mxu0
    %v2720 = vadd.f32 0.0, %v2719
    %v2721 = vpop.f32.mrb[0].mxu0
    %v2722 = vpop.f32.mrb[0].mxu0
    %v2723 = vadd.f32 0.0, %v2722
    %v2724 = vpop.f32.mrb[0].mxu0
    %2725 = vmatprep.mubr.bf16.mxu0 0
    %2726 = vmatmul.mubr.bf16.gmra.mrb[0].mxu0 %v2645
    %v2727 = vpop.f32.mrb[0].mxu0
    %v2728 = vadd.f32 0.0, %v2727
    %v2729 = vpop.f32.mrb[0].mxu0
    %v2730 = vpop.f32.mrb[0].mxu0
    %v2731 = vadd.f32 0.0, %v2730
    %v2732 = vpop.f32.mrb[0].mxu0
    %2733 = vmatprep.mubr.bf16.mxu0 0
    %2734 = vmatmul.mubr.bf16.gmra.mrb[0].mxu0 %v2648
    %v2735 = vpop.f32.mrb[0].mxu0
    %v2736 = vadd.f32 0.0, %v2735
    %v2737 = vpop.f32.mrb[0].mxu0
    %v2738 = vpop.f32.mrb[0].mxu0
    %v2739 = vadd.f32 0.0, %v2738
    %v2740 = vpop.f32.mrb[0].mxu0
    %2741 = vmatprep.mubr.bf16.mxu0 0
    %2742 = vmatmul.mubr.bf16.gmra.mrb[0].mxu0 %v2651
    %v2743 = vpop.f32.mrb[0].mxu0
    %v2744 = vadd.f32 0.0, %v2743
    %v2745 = vpop.f32.mrb[0].mxu0
    %v2746 = vpop.f32.mrb[0].mxu0
    %v2747 = vadd.f32 0.0, %v2746
    %v2748 = vpop.f32.mrb[0].mxu0
    %2749 = vdwg.mxu0
    %v2750 = vld [vmem:[%s8] sm:$0x1]
    %v2751 = vld [vmem:[%s9] sm:$0x1]
    %v2752 = vadd.f32 %v2688, %v2691
    %v2753 = vadd.f32 %v2752, %v2696
    %v2754 = vadd.f32 %v2753, %v2699
    %v2755 = vadd.f32 %v2754, %v2704
    %v2756 = vadd.f32 %v2755, %v2707
    %v2757 = vadd.f32 %v2756, %v2712
    %v2758 = vadd.f32 %v2757, %v2715
    %v2759 = vadd.f32 %v2758, %v2720
    %v2760 = vadd.f32 %v2759, %v2723
    %v2761 = vadd.f32 %v2760, %v2728
    %v2762 = vadd.f32 %v2761, %v2731
    %v2763 = vadd.f32 %v2762, %v2736
    %v2764 = vadd.f32 %v2763, %v2739
    %v2765 = vadd.f32 %v2764, %v2744
    %v2766 = vadd.f32 %v2765, %v2747
    %v2767 = vrot.slane %v2766, 4
    %v2768 = vadd.f32 %v2766, %v2767
    %v2769 = vrot.slane %v2768, 2
    %v2770 = vadd.f32 %v2768, %v2769
    %v2771 = vrot.slane %v2770, 1
    %v2772 = vadd.f32 %v2770, %v2771
    %v2773 = vmul.f32 %v2688, %v2688
    %v2774 = vmul.f32 %v2691, %v2691
    %v2775 = vmul.f32 %v2696, %v2696
    %v2776 = vmul.f32 %v2699, %v2699
    %v2777 = vmul.f32 %v2704, %v2704
    %v2778 = vmul.f32 %v2707, %v2707
    %v2779 = vmul.f32 %v2712, %v2712
    %v2780 = vmul.f32 %v2715, %v2715
    %v2781 = vmul.f32 %v2720, %v2720
    %v2782 = vmul.f32 %v2723, %v2723
    %v2783 = vmul.f32 %v2728, %v2728
    %v2784 = vmul.f32 %v2731, %v2731
    %v2785 = vmul.f32 %v2736, %v2736
    %v2786 = vmul.f32 %v2739, %v2739
    %v2787 = vmul.f32 %v2744, %v2744
    %v2788 = vmul.f32 %v2747, %v2747
    %v2789 = vadd.f32 %v2773, %v2774
    %v2790 = vadd.f32 %v2789, %v2775
    %v2791 = vadd.f32 %v2790, %v2776
    %v2792 = vadd.f32 %v2791, %v2777
    %v2793 = vadd.f32 %v2792, %v2778
    %v2794 = vadd.f32 %v2793, %v2779
    %v2795 = vadd.f32 %v2794, %v2780
    %v2796 = vadd.f32 %v2795, %v2781
    %v2797 = vadd.f32 %v2796, %v2782
    %v2798 = vadd.f32 %v2797, %v2783
    %v2799 = vadd.f32 %v2798, %v2784
    %v2800 = vadd.f32 %v2799, %v2785
    %v2801 = vadd.f32 %v2800, %v2786
    %v2802 = vadd.f32 %v2801, %v2787
    %v2803 = vadd.f32 %v2802, %v2788
    %v2804 = vrot.slane %v2803, 4
    %v2805 = vadd.f32 %v2803, %v2804
    %v2806 = vrot.slane %v2805, 2
    %v2807 = vadd.f32 %v2805, %v2806
    %v2808 = vrot.slane %v2807, 1
    %v2809 = vadd.f32 %v2807, %v2808
    %v2810 = vmul.f32 %v2772, 0.0078125
    %v2811 = vmul.f32 %v2809, 0.0078125
    %v2812 = vmul.f32 %v2810, %v2810
    %v2813 = vsub.f32 %v2811, %v2812
    %v2814 = vmax.f32 %v2813, 0.0
    %v2815 = vadd.f32 %v2814, 1e-05
    %v2816 = vrsqrt.pop %v2815
    %v2817 = vmul.f32 %v2750, %v2816
    %v2818 = vmul.f32 %v2810, %v2817
    %v2819 = vsub.f32 %v2751, %v2818
    %v2821 = vlaneseq
    %v2822 = vshrl.u32 %v2821, 7
    %v2823 = vsub.s32 0, %v2822
    %v2824 = vrot.slane %v2817, %v2823
    %v2826 = vmul.f32 %v2688, %v2824
    %v2827 = vmul.f32 %v2691, %v2824
    %v2828 = vmul.f32 %v2696, %v2824
    %v2829 = vmul.f32 %v2699, %v2824
    %v2830 = vmul.f32 %v2704, %v2824
    %v2831 = vmul.f32 %v2707, %v2824
    %v2832 = vmul.f32 %v2712, %v2824
    %v2833 = vmul.f32 %v2715, %v2824
    %v2834 = vmul.f32 %v2720, %v2824
    %v2835 = vmul.f32 %v2723, %v2824
    %v2836 = vmul.f32 %v2728, %v2824
    %v2837 = vmul.f32 %v2731, %v2824
    %v2838 = vmul.f32 %v2736, %v2824
    %v2839 = vmul.f32 %v2739, %v2824
    %v2840 = vmul.f32 %v2744, %v2824
    %v2841 = vmul.f32 %v2747, %v2824
    %v2843 = vlaneseq
    %v2844 = vshrl.u32 %v2843, 7
    %v2845 = vsub.s32 0, %v2844
    %v2846 = vrot.slane %v2819, %v2845
    %v2848 = vadd.f32 %v2826, %v2846
    %v2849 = vadd.f32 %v2827, %v2846
    %v2850 = vadd.f32 %v2828, %v2846
    %v2851 = vadd.f32 %v2829, %v2846
    %v2852 = vadd.f32 %v2830, %v2846
    %v2853 = vadd.f32 %v2831, %v2846
    %v2854 = vadd.f32 %v2832, %v2846
    %v2855 = vadd.f32 %v2833, %v2846
    %v2856 = vadd.f32 %v2834, %v2846
    %v2857 = vadd.f32 %v2835, %v2846
    %v2858 = vadd.f32 %v2836, %v2846
    %v2859 = vadd.f32 %v2837, %v2846
    %v2860 = vadd.f32 %v2838, %v2846
    %v2861 = vadd.f32 %v2839, %v2846
    %v2862 = vadd.f32 %v2840, %v2846
    %v2863 = vadd.f32 %v2841, %v2846
    %v2864 = vadd.f32 %v2848, %v65
    %v2865 = vadd.f32 %v2849, %v66
    %v2866 = vadd.f32 %v2850, %v67
    %v2867 = vadd.f32 %v2851, %v68
    %v2868 = vadd.f32 %v2852, %v69
    %v2869 = vadd.f32 %v2853, %v70
    %v2870 = vadd.f32 %v2854, %v71
    %v2871 = vadd.f32 %v2855, %v72
    %v2872 = vadd.f32 %v2856, %v73
    %v2873 = vadd.f32 %v2857, %v74
    %v2874 = vadd.f32 %v2858, %v75
    %v2875 = vadd.f32 %v2859, %v76
    %v2876 = vadd.f32 %v2860, %v77
    %v2877 = vadd.f32 %v2861, %v78
    %v2878 = vadd.f32 %v2862, %v79
    %v2879 = vadd.f32 %v2863, %v80
    %v2880 = vmax.f32 %v2864, 0.0
    %v2881 = vmax.f32 %v2865, 0.0
    %v2882 = vmax.f32 %v2866, 0.0
    %v2883 = vmax.f32 %v2867, 0.0
    %v2884 = vmax.f32 %v2868, 0.0
    %v2885 = vmax.f32 %v2869, 0.0
    %v2886 = vmax.f32 %v2870, 0.0
    %v2887 = vmax.f32 %v2871, 0.0
    %v2888 = vmax.f32 %v2872, 0.0
    %v2889 = vmax.f32 %v2873, 0.0
    %v2890 = vmax.f32 %v2874, 0.0
    %v2891 = vmax.f32 %v2875, 0.0
    %v2892 = vmax.f32 %v2876, 0.0
    %v2893 = vmax.f32 %v2877, 0.0
    %v2894 = vmax.f32 %v2878, 0.0
    %v2895 = vmax.f32 %v2879, 0.0
    %2896 = vst [vmem:[#allocation8] sm:$0xff] %v2880
    %2897 = vst [vmem:[#allocation8 + $0x8] sm:$0xff] %v2881
    %2898 = vst [vmem:[#allocation8 + $0x10] sm:$0xff] %v2882
    %2899 = vst [vmem:[#allocation8 + $0x18] sm:$0xff] %v2883
    %2900 = vst [vmem:[#allocation8 + $0x20] sm:$0xff] %v2884
    %2901 = vst [vmem:[#allocation8 + $0x28] sm:$0xff] %v2885
    %2902 = vst [vmem:[#allocation8 + $0x30] sm:$0xff] %v2886
    %2903 = vst [vmem:[#allocation8 + $0x38] sm:$0xff] %v2887
    %2904 = vst [vmem:[#allocation8 + $0x40] sm:$0xff] %v2888
    %2905 = vst [vmem:[#allocation8 + $0x48] sm:$0xff] %v2889
    %2906 = vst [vmem:[#allocation8 + $0x50] sm:$0xff] %v2890
    %2907 = vst [vmem:[#allocation8 + $0x58] sm:$0xff] %v2891
    %2908 = vst [vmem:[#allocation8 + $0x60] sm:$0xff] %v2892
    %2909 = vst [vmem:[#allocation8 + $0x68] sm:$0xff] %v2893
    %2910 = vst [vmem:[#allocation8 + $0x70] sm:$0xff] %v2894
    %2911 = vst [vmem:[#allocation8 + $0x78] sm:$0xff] %v2895
    // Predicated region
    $region50: #{tpu_custom_call.1} parent=1 // pred_check
      _
    $region51: #{tpu_custom_call.1} parent=1 // pred_check_branch
      %2913 = sbr.rel (0) target = $region53
    $region52: #{tpu_custom_call.1} parent=1 // pred_region
      %s2915 = ssub.s32 2048, 2048
      %2916 = vsyncadd [#allocation5], %s2915
      %s2917 = sshll.u32 [#allocation8], 4
      %s2918 = int_to_ptr.vmem [resolvable:$true] %s2917
      %2923 = dma.vmem_to_hbm [thread:$0]  %s2918, 2048, %s10, [#allocation5], 128, 128, 8
    $region53: #{tpu_custom_call.1} parent=1 // pred_fallthru
      _
    // Predicated region
    $region54: #{tpu_custom_call.1} parent=1 // pred_check
      _
    $region55: #{tpu_custom_call.1} parent=1 // pred_check_branch
      %2925 = sbr.rel (0) target = $region57
    $region56: #{tpu_custom_call.1} parent=1 // pred_region
      %2926 = dma.done [#allocation5], 2048
    $region57: #{tpu_custom_call.1} parent=1 // pred_fallthru
      _
    %2927 = vsyncpa [#allocation4], 1
    %2928 = vsyncpa [#allocation7], 1
    %2929 = vsyncpa [#allocation5], 1

</llo_original>
